<compile_context>
chip_gen: v7x
topology: tpu7x:2x2x1
jax: 0.10.0
libtpu: 0.0.40
codegen_flags: <defaults>
</compile_context>

<pallas_src>
import jax
import jax.numpy as jnp
from jax import lax
from jax.experimental import pallas as pl
from jax.experimental.pallas import tpu as pltpu


def _vmem_capacity_bytes():
    """Per-TensorCore VMEM capacity; conservative (v7x) fallback if unknown."""
    try:
        cap = getattr(pltpu.get_tpu_info(), "vmem_capacity_bytes", None)
        if cap:
            return int(cap)
    except Exception:
        pass
    return 64 * 1024 * 1024


def _pick_batch_block(N, H, W, C, Cout):
    """Batch-block size + vmem limit from a generation-aware VMEM budget."""
    cap = _vmem_capacity_bytes()
    budget = max(4 << 20, int(cap * 0.30))
    per_img = (2 * 2 * H * W * C          # bf16 input block, double-buffered
               + 2 * 2 * H * W * Cout     # bf16 output block, double-buffered
               + 4 * 4 * H * W * C        # f32 intermediates: x, x_m, x_p, acc/dw
               + 2 * H * W * C            # bf16 matmul LHS
               + 4 * H * W * Cout         # f32 matmul result
               + 2 * H * W * Cout)        # bf16 staged output
    nb = max(1, min(N, budget // max(per_img, 1)))
    # Keep at least ~4 grid steps (2 per TensorCore) whenever the batch allows,
    # so BlockSpec double-buffering has DMA to overlap and megacore has work.
    if N >= 4:
        nb = min(nb, N // 4)
    elif N >= 2:
        nb = min(nb, N // 2)
    nb = max(nb, 1)
    while N % nb:
        nb -= 1
    vmem_limit = int(min(cap * 3 // 4, max(32 << 20, 3 * nb * per_img)))
    vmem_limit = max(vmem_limit, 32 << 20)
    return nb, vmem_limit


def _dws_conv_kernel(x_ref, dww_ref, b1_ref, pww_ref, b2_ref, o_ref):
    """One batch block per grid step.

    x_ref   : (NB, H, W, C)      bf16 NHWC input block
    dww_ref : (3, 3, C)          f32 depthwise filter, BN1 scale folded in
    b1_ref  : (1, C)             f32 folded BN1 bias
    pww_ref : (C, Cout)          bf16 pointwise filter, BN2 scale folded in
    b2_ref  : (1, Cout)          f32 folded BN2 bias
    o_ref   : (NB, H, W, Cout)   bf16 output block
    """
    NB, H, W, C = x_ref.shape
    Cout = o_ref.shape[-1]

    x = x_ref[...].astype(jnp.float32)                      # (NB, H, W, C)

    # --- W (sublane-axis) +/-1 shifts: XLU roll + one-column zero mask (the
    #     conv's zero padding).  The reshape merges only major dims (layout-free
    #     when W % 8 == 0; at worst a cheap relayout).
    x3 = x.reshape(NB * H, W, C)
    col = lax.broadcasted_iota(jnp.int32, x3.shape, 1)
    x_m = jnp.where(col == 0, 0.0,
                    pltpu.roll(x3, shift=1, axis=1)).reshape(NB, H, W, C)
    x_p = jnp.where(col == W - 1, 0.0,
                    pltpu.roll(x3, shift=W - 1, axis=1)).reshape(NB, H, W, C)
    strips = (x_m, x, x_p)          # strips[kw][.., w, :] == x[.., w + kw - 1, :]

    # --- H +/-1 shifts: selections along the untiled H axis (no sublane/lane
    #     relayout), zero row supplies the conv's top/bottom padding.
    zrow = jnp.zeros((NB, 1, W, C), jnp.float32)

    def h_shift(s, kh):
        if kh == 0:                                          # x[h-1]
            return jnp.concatenate([zrow, s[:, :H - 1]], axis=1)
        if kh == 2:                                          # x[h+1]
            return jnp.concatenate([s[:, 1:], zrow], axis=1)
        return s

    dww = dww_ref[...]                                       # (3, 3, C) f32
    acc = None
    for kw in range(3):
        for kh in range(3):
            term = h_shift(strips[kw], kh) * dww[kh, kw, :]
            acc = term if acc is None else acc + term        # first tap inits acc

    # Folded BN1 bias (scale already in dww) + ReLU.
    dw = jnp.maximum(acc + b1_ref[0], 0.0)                   # (NB, H, W, C) f32

    # Pointwise 1x1 conv: one bf16 MXU matmul over channels (f32 accumulate),
    # then folded BN2 bias + ReLU.
    y = jnp.dot(dw.reshape(NB * H * W, C).astype(jnp.bfloat16), pww_ref[...],
                preferred_element_type=jnp.float32)          # (NB*H*W, Cout)
    y = jnp.maximum(y + b2_ref[0], 0.0)
    o_ref[...] = y.reshape(NB, H, W, Cout).astype(o_ref.dtype)


def depthwise_separable_conv(x_nchw, dw_w, g1, b1, m1, v1, pw_w, g2, b2, m2, v2,
                             eps=1e-5):
    """x_nchw: (N, Cin, H, W). dw_w: (Cin, 1, 3, 3). pw_w: (Cout, Cin, 1, 1)."""
    N, C, H, W = x_nchw.shape
    Cout = pw_w.shape[0]

    # ---- Layout glue (NCHW interface); activations cross HBM in bf16.
    x = jnp.transpose(x_nchw, (0, 2, 3, 1)).astype(jnp.bfloat16)   # (N, H, W, C)

    # ---- Fold eval-mode BN into conv weights (scale) and bias vectors.
    s1 = (g1 / jnp.sqrt(v1 + eps)).astype(jnp.float32)              # (C,)
    dww = jnp.transpose(dw_w[:, 0, :, :], (1, 2, 0)).astype(jnp.float32) * s1
    b1f = (b1 - m1 * s1).astype(jnp.float32).reshape(1, C)

    s2 = (g2 / jnp.sqrt(v2 + eps)).astype(jnp.float32)              # (Cout,)
    pww = (jnp.transpose(pw_w[:, :, 0, 0], (1, 0)).astype(jnp.float32)
           * s2).astype(jnp.bfloat16)                               # (C, Cout) bf16
    b2f = (b2 - m2 * s2).astype(jnp.float32).reshape(1, Cout)

    nb, vmem_limit = _pick_batch_block(N, H, W, C, Cout)
    grid = (N // nb,)

    flops = N * H * W * (2 * 9 * C + 2 * C * Cout)
    bytes_accessed = (2 * N * H * W * C + 2 * N * H * W * Cout
                      + 4 * (9 * C + C + Cout) + 2 * C * Cout)

    out_nhwc = pl.pallas_call(
        _dws_conv_kernel,
        out_shape=jax.ShapeDtypeStruct((N, H, W, Cout), jnp.bfloat16),
        grid_spec=pltpu.PrefetchScalarGridSpec(
            num_scalar_prefetch=0,
            grid=grid,
            in_specs=[
                pl.BlockSpec((nb, H, W, C), lambda n: (n, 0, 0, 0)),
                pl.BlockSpec((3, 3, C), lambda n: (0, 0, 0)),
                pl.BlockSpec((1, C), lambda n: (0, 0)),
                pl.BlockSpec((C, Cout), lambda n: (0, 0)),
                pl.BlockSpec((1, Cout), lambda n: (0, 0)),
            ],
            out_specs=pl.BlockSpec((nb, H, W, Cout), lambda n: (n, 0, 0, 0)),
        ),
        compiler_params=pltpu.CompilerParams(
            dimension_semantics=("parallel",),
            vmem_limit_bytes=vmem_limit,
        ),
        cost_estimate=pl.CostEstimate(
            flops=flops, transcendentals=0, bytes_accessed=bytes_accessed),
    )(x, dww, b1f, pww, b2f)

    # Back to NCHW, f32 (slice-free: no padded channels; transpose fuses in XLA).
    return jnp.transpose(out_nhwc, (0, 3, 1, 2)).astype(jnp.float32)


def _reference(x_nchw, dw_w, g1, b1, m1, v1, pw_w, g2, b2, m2, v2, eps=1e-5):
    """Pure-JAX (lax.conv) reference matching PyTorch eval-mode semantics."""
    x = jnp.transpose(x_nchw, (0, 2, 3, 1))
    rhs_dw = jnp.transpose(dw_w, (2, 3, 1, 0))  # (3,3,1,C)
    y = lax.conv_general_dilated(
        x, rhs_dw, window_strides=(1, 1), padding=((1, 1), (1, 1)),
        dimension_numbers=("NHWC", "HWIO", "NHWC"),
        feature_group_count=x.shape[-1])
    y = (y - m1) / jnp.sqrt(v1 + eps) * g1 + b1
    y = jnp.maximum(y, 0.0)
    rhs_pw = jnp.transpose(pw_w, (2, 3, 1, 0))  # (1,1,C,Cout)
    z = lax.conv_general_dilated(
        y, rhs_pw, window_strides=(1, 1), padding="VALID",
        dimension_numbers=("NHWC", "HWIO", "NHWC"))
    z = (z - m2) / jnp.sqrt(v2 + eps) * g2 + b2
    z = jnp.maximum(z, 0.0)
    return jnp.transpose(z, (0, 3, 1, 2))


if __name__ == "__main__":
    key = jax.random.PRNGKey(0)
    N, Cin, Cout, H, W = 2, 4, 8, 16, 16

    ks = jax.random.split(key, 8)
    x = jax.random.normal(ks[0], (N, Cin, H, W), jnp.float32)
    dw_w = jax.random.normal(ks[1], (Cin, 1, 3, 3), jnp.float32) * 0.3
    pw_w = jax.random.normal(ks[2], (Cout, Cin, 1, 1), jnp.float32) * 0.3
    # BatchNorm params (deterministic, inference mode)
    g1 = 1.0 + 0.1 * jax.random.normal(ks[3], (Cin,), jnp.float32)
    b1 = 0.1 * jax.random.normal(ks[4], (Cin,), jnp.float32)
    m1 = 0.05 * jnp.arange(Cin, dtype=jnp.float32)
    v1 = 1.0 + 0.02 * jnp.arange(Cin, dtype=jnp.float32)
    g2 = 1.0 + 0.1 * jax.random.normal(ks[5], (Cout,), jnp.float32)
    b2 = 0.1 * jax.random.normal(ks[6], (Cout,), jnp.float32)
    m2 = 0.05 * jnp.arange(Cout, dtype=jnp.float32)
    v2 = 1.0 + 0.02 * jnp.arange(Cout, dtype=jnp.float32)

    out = depthwise_separable_conv(x, dw_w, g1, b1, m1, v1, pw_w, g2, b2, m2, v2)
    out = jax.block_until_ready(out)

    ref = _reference(x, dw_w, g1, b1, m1, v1, pw_w, g2, b2, m2, v2)
    assert out.shape == (N, Cout, H, W)
    # Tolerance reflects the deliberate bf16 HBM activations / bf16 MXU operands
    # (accumulation is f32); expected error ~1e-2 absolute at these magnitudes.
    assert jnp.allclose(out, ref, atol=2e-2, rtol=2e-2), "mismatch vs reference"

    print("KERNEL_OK")
</pallas_src>

<mosaic_0001>
module attributes {stable_mosaic.version = 11 : i64} {
  func.func @_dws_conv_kernel(%arg0: i32, %arg1: memref<1x16x16x4xbf16, #tpu.memory_space<vmem>>, %arg2: memref<3x3x4xf32, #tpu.memory_space<vmem>>, %arg3: memref<1x4xf32, #tpu.memory_space<vmem>>, %arg4: memref<4x8xbf16, #tpu.memory_space<vmem>>, %arg5: memref<1x8xf32, #tpu.memory_space<vmem>>, %arg6: memref<1x16x16x8xbf16, #tpu.memory_space<vmem>>) attributes {dimension_semantics = [#tpu.dimension_semantics<parallel>], iteration_bounds = array<i64: 2>, scalar_prefetch = 0 : i64, scratch_operands = 0 : i64, tpu.core_type = #tpu.core_type<tc>, window_params = [{transform_indices = @transform_0, window_bounds = array<i64: 1, 16, 16, 4>}, {pipeline_mode = #tpu.pipeline_mode<synchronous>, transform_indices = @transform_1, window_bounds = array<i64: 3, 3, 4>}, {pipeline_mode = #tpu.pipeline_mode<synchronous>, transform_indices = @transform_2, window_bounds = array<i64: 1, 4>}, {pipeline_mode = #tpu.pipeline_mode<synchronous>, transform_indices = @transform_3, window_bounds = array<i64: 4, 8>}, {pipeline_mode = #tpu.pipeline_mode<synchronous>, transform_indices = @transform_4, window_bounds = array<i64: 1, 8>}, {transform_indices = @transform_5, window_bounds = array<i64: 1, 16, 16, 8>}]} {
    %c0 = arith.constant 0 : index
    %c0_0 = arith.constant 0 : index
    %c0_1 = arith.constant 0 : index
    %c0_2 = arith.constant 0 : index
    %0 = vector.load %arg1[%c0, %c0_0, %c0_1, %c0_2] : memref<1x16x16x4xbf16, #tpu.memory_space<vmem>>, vector<1x16x16x4xbf16>
    %1 = arith.extf %0 : vector<1x16x16x4xbf16> to vector<1x16x16x4xf32>
    %2 = vector.shape_cast %1 : vector<1x16x16x4xf32> to vector<16x16x4xf32>
    %3 = tpu.iota {dimensions = array<i32: 1>} : vector<16x16x4xi32>
    %c0_i32 = arith.constant 0 : i32
    %4 = vector.broadcast %c0_i32 : i32 to vector<16x16x4xi32>
    %5 = arith.cmpi eq, %3, %4 : vector<16x16x4xi32>
    %c1_i32 = arith.constant 1 : i32
    %6 = tpu.dynamic_rotate %2 by %c1_i32 dim 1 : vector<16x16x4xf32>, i32 -> vector<16x16x4xf32>
    %cst = arith.constant 0.000000e+00 : f32
    %7 = vector.broadcast %cst : f32 to vector<16x16x4xf32>
    %8 = arith.select %5, %7, %6 : vector<16x16x4xi1>, vector<16x16x4xf32>
    %9 = vector.shape_cast %8 : vector<16x16x4xf32> to vector<1x16x16x4xf32>
    %c15_i32 = arith.constant 15 : i32
    %10 = vector.broadcast %c15_i32 : i32 to vector<16x16x4xi32>
    %11 = arith.cmpi eq, %3, %10 : vector<16x16x4xi32>
    %c15_i32_3 = arith.constant 15 : i32
    %12 = tpu.dynamic_rotate %2 by %c15_i32_3 dim 1 : vector<16x16x4xf32>, i32 -> vector<16x16x4xf32>
    %cst_4 = arith.constant 0.000000e+00 : f32
    %13 = vector.broadcast %cst_4 : f32 to vector<16x16x4xf32>
    %14 = arith.select %11, %13, %12 : vector<16x16x4xi1>, vector<16x16x4xf32>
    %15 = vector.shape_cast %14 : vector<16x16x4xf32> to vector<1x16x16x4xf32>
    %cst_5 = arith.constant 0.000000e+00 : f32
    %16 = vector.broadcast %cst_5 : f32 to vector<1x1x16x4xf32>
    %c0_6 = arith.constant 0 : index
    %c0_7 = arith.constant 0 : index
    %c0_8 = arith.constant 0 : index
    %17 = vector.load %arg2[%c0_6, %c0_7, %c0_8] : memref<3x3x4xf32, #tpu.memory_space<vmem>>, vector<3x3x4xf32>
    %18 = vector.extract_strided_slice %9 {offsets = [0, 0, 0, 0], sizes = [1, 15, 16, 4], strides = [1, 1, 1, 1]} : vector<1x16x16x4xf32> to vector<1x15x16x4xf32>
    %19 = tpu.concatenate %16, %18 in 1 : vector<1x1x16x4xf32>, vector<1x15x16x4xf32> -> vector<1x16x16x4xf32>
    %20 = vector.extract_strided_slice %17 {offsets = [0, 0, 0], sizes = [1, 1, 4], strides = [1, 1, 1]} : vector<3x3x4xf32> to vector<1x1x4xf32>
    %21 = vector.shape_cast %20 : vector<1x1x4xf32> to vector<4xf32>
    %22 = vector.shape_cast %21 : vector<4xf32> to vector<1x1x1x4xf32>
    %23 = vector.broadcast %22 : vector<1x1x1x4xf32> to vector<1x16x16x4xf32>
    %24 = arith.mulf %19, %23 : vector<1x16x16x4xf32>
    %25 = vector.extract_strided_slice %17 {offsets = [1, 0, 0], sizes = [1, 1, 4], strides = [1, 1, 1]} : vector<3x3x4xf32> to vector<1x1x4xf32>
    %26 = vector.shape_cast %25 : vector<1x1x4xf32> to vector<4xf32>
    %27 = vector.shape_cast %26 : vector<4xf32> to vector<1x1x1x4xf32>
    %28 = vector.broadcast %27 : vector<1x1x1x4xf32> to vector<1x16x16x4xf32>
    %29 = arith.mulf %9, %28 : vector<1x16x16x4xf32>
    %30 = arith.addf %24, %29 : vector<1x16x16x4xf32>
    %31 = vector.extract_strided_slice %9 {offsets = [0, 1, 0, 0], sizes = [1, 15, 16, 4], strides = [1, 1, 1, 1]} : vector<1x16x16x4xf32> to vector<1x15x16x4xf32>
    %32 = tpu.concatenate %31, %16 in 1 : vector<1x15x16x4xf32>, vector<1x1x16x4xf32> -> vector<1x16x16x4xf32>
    %33 = vector.extract_strided_slice %17 {offsets = [2, 0, 0], sizes = [1, 1, 4], strides = [1, 1, 1]} : vector<3x3x4xf32> to vector<1x1x4xf32>
    %34 = vector.shape_cast %33 : vector<1x1x4xf32> to vector<4xf32>
    %35 = vector.shape_cast %34 : vector<4xf32> to vector<1x1x1x4xf32>
    %36 = vector.broadcast %35 : vector<1x1x1x4xf32> to vector<1x16x16x4xf32>
    %37 = arith.mulf %32, %36 : vector<1x16x16x4xf32>
    %38 = arith.addf %30, %37 : vector<1x16x16x4xf32>
    %39 = vector.extract_strided_slice %1 {offsets = [0, 0, 0, 0], sizes = [1, 15, 16, 4], strides = [1, 1, 1, 1]} : vector<1x16x16x4xf32> to vector<1x15x16x4xf32>
    %40 = tpu.concatenate %16, %39 in 1 : vector<1x1x16x4xf32>, vector<1x15x16x4xf32> -> vector<1x16x16x4xf32>
    %41 = vector.extract_strided_slice %17 {offsets = [0, 1, 0], sizes = [1, 1, 4], strides = [1, 1, 1]} : vector<3x3x4xf32> to vector<1x1x4xf32>
    %42 = vector.shape_cast %41 : vector<1x1x4xf32> to vector<4xf32>
    %43 = vector.shape_cast %42 : vector<4xf32> to vector<1x1x1x4xf32>
    %44 = vector.broadcast %43 : vector<1x1x1x4xf32> to vector<1x16x16x4xf32>
    %45 = arith.mulf %40, %44 : vector<1x16x16x4xf32>
    %46 = arith.addf %38, %45 : vector<1x16x16x4xf32>
    %47 = vector.extract_strided_slice %17 {offsets = [1, 1, 0], sizes = [1, 1, 4], strides = [1, 1, 1]} : vector<3x3x4xf32> to vector<1x1x4xf32>
    %48 = vector.shape_cast %47 : vector<1x1x4xf32> to vector<4xf32>
    %49 = vector.shape_cast %48 : vector<4xf32> to vector<1x1x1x4xf32>
    %50 = vector.broadcast %49 : vector<1x1x1x4xf32> to vector<1x16x16x4xf32>
    %51 = arith.mulf %1, %50 : vector<1x16x16x4xf32>
    %52 = arith.addf %46, %51 : vector<1x16x16x4xf32>
    %53 = vector.extract_strided_slice %1 {offsets = [0, 1, 0, 0], sizes = [1, 15, 16, 4], strides = [1, 1, 1, 1]} : vector<1x16x16x4xf32> to vector<1x15x16x4xf32>
    %54 = tpu.concatenate %53, %16 in 1 : vector<1x15x16x4xf32>, vector<1x1x16x4xf32> -> vector<1x16x16x4xf32>
    %55 = vector.extract_strided_slice %17 {offsets = [2, 1, 0], sizes = [1, 1, 4], strides = [1, 1, 1]} : vector<3x3x4xf32> to vector<1x1x4xf32>
    %56 = vector.shape_cast %55 : vector<1x1x4xf32> to vector<4xf32>
    %57 = vector.shape_cast %56 : vector<4xf32> to vector<1x1x1x4xf32>
    %58 = vector.broadcast %57 : vector<1x1x1x4xf32> to vector<1x16x16x4xf32>
    %59 = arith.mulf %54, %58 : vector<1x16x16x4xf32>
    %60 = arith.addf %52, %59 : vector<1x16x16x4xf32>
    %61 = vector.extract_strided_slice %15 {offsets = [0, 0, 0, 0], sizes = [1, 15, 16, 4], strides = [1, 1, 1, 1]} : vector<1x16x16x4xf32> to vector<1x15x16x4xf32>
    %62 = tpu.concatenate %16, %61 in 1 : vector<1x1x16x4xf32>, vector<1x15x16x4xf32> -> vector<1x16x16x4xf32>
    %63 = vector.extract_strided_slice %17 {offsets = [0, 2, 0], sizes = [1, 1, 4], strides = [1, 1, 1]} : vector<3x3x4xf32> to vector<1x1x4xf32>
    %64 = vector.shape_cast %63 : vector<1x1x4xf32> to vector<4xf32>
    %65 = vector.shape_cast %64 : vector<4xf32> to vector<1x1x1x4xf32>
    %66 = vector.broadcast %65 : vector<1x1x1x4xf32> to vector<1x16x16x4xf32>
    %67 = arith.mulf %62, %66 : vector<1x16x16x4xf32>
    %68 = arith.addf %60, %67 : vector<1x16x16x4xf32>
    %69 = vector.extract_strided_slice %17 {offsets = [1, 2, 0], sizes = [1, 1, 4], strides = [1, 1, 1]} : vector<3x3x4xf32> to vector<1x1x4xf32>
    %70 = vector.shape_cast %69 : vector<1x1x4xf32> to vector<4xf32>
    %71 = vector.shape_cast %70 : vector<4xf32> to vector<1x1x1x4xf32>
    %72 = vector.broadcast %71 : vector<1x1x1x4xf32> to vector<1x16x16x4xf32>
    %73 = arith.mulf %15, %72 : vector<1x16x16x4xf32>
    %74 = arith.addf %68, %73 : vector<1x16x16x4xf32>
    %75 = vector.extract_strided_slice %15 {offsets = [0, 1, 0, 0], sizes = [1, 15, 16, 4], strides = [1, 1, 1, 1]} : vector<1x16x16x4xf32> to vector<1x15x16x4xf32>
    %76 = tpu.concatenate %75, %16 in 1 : vector<1x15x16x4xf32>, vector<1x1x16x4xf32> -> vector<1x16x16x4xf32>
    %77 = vector.extract_strided_slice %17 {offsets = [2, 2, 0], sizes = [1, 1, 4], strides = [1, 1, 1]} : vector<3x3x4xf32> to vector<1x1x4xf32>
    %78 = vector.shape_cast %77 : vector<1x1x4xf32> to vector<4xf32>
    %79 = vector.shape_cast %78 : vector<4xf32> to vector<1x1x1x4xf32>
    %80 = vector.broadcast %79 : vector<1x1x1x4xf32> to vector<1x16x16x4xf32>
    %81 = arith.mulf %76, %80 : vector<1x16x16x4xf32>
    %82 = arith.addf %74, %81 : vector<1x16x16x4xf32>
    %c0_9 = arith.constant 0 : index
    %c0_10 = arith.constant 0 : index
    %83 = vector.load %arg3[%c0_9, %c0_10] : memref<1x4xf32, #tpu.memory_space<vmem>>, vector<1x4xf32>
    %84 = vector.shape_cast %83 : vector<1x4xf32> to vector<4xf32>
    %85 = vector.shape_cast %84 : vector<4xf32> to vector<1x1x1x4xf32>
    %86 = vector.broadcast %85 : vector<1x1x1x4xf32> to vector<1x16x16x4xf32>
    %87 = arith.addf %82, %86 : vector<1x16x16x4xf32>
    %cst_11 = arith.constant 0.000000e+00 : f32
    %88 = vector.broadcast %cst_11 : f32 to vector<1x16x16x4xf32>
    %89 = arith.maximumf %87, %88 : vector<1x16x16x4xf32>
    %90 = vector.shape_cast %89 : vector<1x16x16x4xf32> to vector<256x4xf32>
    %91 = arith.truncf %90 : vector<256x4xf32> to vector<256x4xbf16>
    %c0_12 = arith.constant 0 : index
    %c0_13 = arith.constant 0 : index
    %92 = vector.load %arg4[%c0_12, %c0_13] : memref<4x8xbf16, #tpu.memory_space<vmem>>, vector<4x8xbf16>
    %cst_14 = arith.constant dense<0.000000e+00> : vector<256x8xf32>
    %93 = tpu.matmul %91, %92, %cst_14 {dimension_numbers = #tpu.dot_dimension_numbers<[1], [0], [0], [1], [0, 0, 1, 1], [], []>} : vector<256x4xbf16>, vector<4x8xbf16>, vector<256x8xf32> -> vector<256x8xf32>
    %c0_15 = arith.constant 0 : index
    %c0_16 = arith.constant 0 : index
    %94 = vector.load %arg5[%c0_15, %c0_16] : memref<1x8xf32, #tpu.memory_space<vmem>>, vector<1x8xf32>
    %95 = vector.shape_cast %94 : vector<1x8xf32> to vector<8xf32>
    %96 = vector.shape_cast %95 : vector<8xf32> to vector<1x8xf32>
    %97 = vector.broadcast %96 : vector<1x8xf32> to vector<256x8xf32>
    %98 = arith.addf %93, %97 : vector<256x8xf32>
    %cst_17 = arith.constant 0.000000e+00 : f32
    %99 = vector.broadcast %cst_17 : f32 to vector<256x8xf32>
    %100 = arith.maximumf %98, %99 : vector<256x8xf32>
    %101 = vector.shape_cast %100 : vector<256x8xf32> to vector<1x16x16x8xf32>
    %102 = arith.truncf %101 : vector<1x16x16x8xf32> to vector<1x16x16x8xbf16>
    %c0_18 = arith.constant 0 : index
    %c0_19 = arith.constant 0 : index
    %c0_20 = arith.constant 0 : index
    %c0_21 = arith.constant 0 : index
    %103 = vector.load %arg6[%c0_18, %c0_19, %c0_20, %c0_21] : memref<1x16x16x8xbf16, #tpu.memory_space<vmem>>, vector<1x16x16x8xbf16>
    tpu.vector_store %arg6[%c0_18, %c0_19, %c0_20, %c0_21], %102 {strides = array<i32>} : memref<1x16x16x8xbf16, #tpu.memory_space<vmem>>, vector<1x16x16x8xbf16>,
    return
  }
  func.func @transform_0(%arg0: i32) -> (i32, i32, i32, i32) {
    %c0_i32 = arith.constant 0 : i32
    %c0_i32_0 = arith.constant 0 : i32
    %c0_i32_1 = arith.constant 0 : i32
    %c0_i32_2 = arith.constant 0 : i32
    return %arg0, %c0_i32, %c0_i32_0, %c0_i32_1 : i32, i32, i32, i32
  }
  func.func @transform_1(%arg0: i32) -> (i32, i32, i32) {
    %c0_i32 = arith.constant 0 : i32
    %c0_i32_0 = arith.constant 0 : i32
    %c0_i32_1 = arith.constant 0 : i32
    %c0_i32_2 = arith.constant 0 : i32
    return %c0_i32, %c0_i32_0, %c0_i32_1 : i32, i32, i32
  }
  func.func @transform_2(%arg0: i32) -> (i32, i32) {
    %c0_i32 = arith.constant 0 : i32
    %c0_i32_0 = arith.constant 0 : i32
    %c0_i32_1 = arith.constant 0 : i32
    return %c0_i32, %c0_i32_0 : i32, i32
  }
  func.func @transform_3(%arg0: i32) -> (i32, i32) {
    %c0_i32 = arith.constant 0 : i32
    %c0_i32_0 = arith.constant 0 : i32
    %c0_i32_1 = arith.constant 0 : i32
    return %c0_i32, %c0_i32_0 : i32, i32
  }
  func.func @transform_4(%arg0: i32) -> (i32, i32) {
    %c0_i32 = arith.constant 0 : i32
    %c0_i32_0 = arith.constant 0 : i32
    %c0_i32_1 = arith.constant 0 : i32
    return %c0_i32, %c0_i32_0 : i32, i32
  }
  func.func @transform_5(%arg0: i32) -> (i32, i32, i32, i32) {
    %c0_i32 = arith.constant 0 : i32
    %c0_i32_0 = arith.constant 0 : i32
    %c0_i32_1 = arith.constant 0 : i32
    %c0_i32_2 = arith.constant 0 : i32
    return %arg0, %c0_i32, %c0_i32_0, %c0_i32_1 : i32, i32, i32, i32
  }
}

</mosaic_0001>

<llo_original>
// kernel: tpu_custom_call.1
$region0: #{tpu_custom_call.1}
  #allocation0 [shape = 'u32[]', space=smem, size = 0x4, offset = 0x4, fixed_abs, tag = 'smem constant byte address 0x4 - core index']
  #allocation1 [shape = 'u32[144,128]{1,0:T(1,128)}', space=vmem, size = 0x12000, scoped, tag = 'internal scratch']
  %s0 = inlined_call_operand.vmem [shape: bf16[2,16,16,4], index: 0, kind: input, shape index: {}]
  %s1 = inlined_call_operand.vmem [shape: f32[3,3,4], index: 1, kind: input, shape index: {}]
  %s2 = inlined_call_operand.vmem [shape: f32[1,4], index: 2, kind: input, shape index: {}]
  %s3 = inlined_call_operand.vmem [shape: bf16[4,8], index: 3, kind: input, shape index: {}]
  %s4 = inlined_call_operand.vmem [shape: f32[1,8], index: 4, kind: input, shape index: {}]
  %s5 = inlined_call_operand.vmem [shape: bf16[2,16,16,8], index: 5, kind: output, shape index: {}]
  %s6 = sld [smem:[#allocation0]]
  $region53: #{tpu_custom_call.1} parent=0
    _
  %s8 = ssub.s32 1, %s6
  %s9 = scalar_select 0, %s8, %s6
  loop: start=0, step=1, limit=4
  $region2: #{tpu_custom_call.1} parent=0 // loop_pre_header
    _
  $region3: #{tpu_custom_call.1} parent=0 // loop_header
    %s11 = sphi 0, %s15
    %p12 = scmp.ge.s32.totalorder %s11, 4
    %s21 = sphi 0, %s23
    %s24 = sphi 0, %s21
    %s25 = sphi 0, %s24
    %s41 = sphi 0, %s25
    %s45 = sphi 0, %s45
    %s47 = sphi 0, %s45
    %s48 = sphi 0, %s47
    %s62 = sphi 0, %s48
    %s66 = sphi 0, %s66
    %s68 = sphi 0, %s66
    %s69 = sphi 0, %s68
    %s83 = sphi 0, %s69
    %s87 = sphi 0, %s87
    %s89 = sphi 0, %s87
    %s90 = sphi 0, %s89
    %s104 = sphi 0, %s90
    %s108 = sphi 0, %s108
    %s110 = sphi 0, %s108
    %s111 = sphi 0, %s110
    %s125 = sphi 0, %s111
    %s131 = sphi 0, %s133
    %s134 = sphi 0, %s131
    %s135 = sphi 0, %s134
    %s151 = sphi 0, %s135
  $region4: #{tpu_custom_call.1} parent=0 // loop_header_branch
    %14 = sbr.rel (%p12) target = $region8
  $region5: #{tpu_custom_call.1} parent=0 // loop_body
    %s16 = ssub.s32 %s11, 1
    %s17 = ssub.s32 %s11, 2
    %s18 = sadd.s32 %s11, 1
    %s19 = ssub.s32 %s11, %s18
    %p20 = scmp.eq.s32.totalorder %s19, 0
    %s22 = sadd.s32 %s21, 1
    %s23 = scalar_select %p20, %s21, %s22
    %p26 = pneg %p20
    %p27 = scmp.eq.s32.totalorder %s11, 1
    %p28 = por %p26, %p27
    %p29 = scmp.ne.s32.totalorder %s21, %s24
    %p30 = scmp.eq.s32.totalorder %s11, 0
    %p31 = por %p29, %p30
    %p32 = scmp.ne.s32.totalorder %s21, %s24
    %p33 = scmp.eq.s32.totalorder %s16, 1
    %p34 = por %p32, %p33
    %p35 = scmp.ne.s32.totalorder %s24, %s25
    %p36 = scmp.eq.s32.totalorder %s16, 0
    %p37 = por %p35, %p36
    %p38 = scmp.ne.s32.totalorder %s24, %s25
    %p39 = scmp.eq.s32.totalorder %s17, 1
    %p40 = por %p38, %p39
    %p42 = scmp.ne.s32.totalorder %s25, %s41
    %p43 = scmp.eq.s32.totalorder %s17, 0
    %p44 = por %p42, %p43
    %s46 = sadd.s32 %s45, 1
    %p49 = scmp.eq.s32.totalorder %s11, 1
    %p50 = scmp.ne.s32.totalorder %s45, %s47
    %p51 = scmp.eq.s32.totalorder %s11, 0
    %p52 = por %p50, %p51
    %p53 = scmp.ne.s32.totalorder %s45, %s47
    %p54 = scmp.eq.s32.totalorder %s16, 1
    %p55 = por %p53, %p54
    %p56 = scmp.ne.s32.totalorder %s47, %s48
    %p57 = scmp.eq.s32.totalorder %s16, 0
    %p58 = por %p56, %p57
    %p59 = scmp.ne.s32.totalorder %s47, %s48
    %p60 = scmp.eq.s32.totalorder %s17, 1
    %p61 = por %p59, %p60
    %p63 = scmp.ne.s32.totalorder %s48, %s62
    %p64 = scmp.eq.s32.totalorder %s17, 0
    %p65 = por %p63, %p64
    %s67 = sadd.s32 %s66, 1
    %p70 = scmp.eq.s32.totalorder %s11, 1
    %p71 = scmp.ne.s32.totalorder %s66, %s68
    %p72 = scmp.eq.s32.totalorder %s11, 0
    %p73 = por %p71, %p72
    %p74 = scmp.ne.s32.totalorder %s66, %s68
    %p75 = scmp.eq.s32.totalorder %s16, 1
    %p76 = por %p74, %p75
    %p77 = scmp.ne.s32.totalorder %s68, %s69
    %p78 = scmp.eq.s32.totalorder %s16, 0
    %p79 = por %p77, %p78
    %p80 = scmp.ne.s32.totalorder %s68, %s69
    %p81 = scmp.eq.s32.totalorder %s17, 1
    %p82 = por %p80, %p81
    %p84 = scmp.ne.s32.totalorder %s69, %s83
    %p85 = scmp.eq.s32.totalorder %s17, 0
    %p86 = por %p84, %p85
    %s88 = sadd.s32 %s87, 1
    %p91 = scmp.eq.s32.totalorder %s11, 1
    %p92 = scmp.ne.s32.totalorder %s87, %s89
    %p93 = scmp.eq.s32.totalorder %s11, 0
    %p94 = por %p92, %p93
    %p95 = scmp.ne.s32.totalorder %s87, %s89
    %p96 = scmp.eq.s32.totalorder %s16, 1
    %p97 = por %p95, %p96
    %p98 = scmp.ne.s32.totalorder %s89, %s90
    %p99 = scmp.eq.s32.totalorder %s16, 0
    %p100 = por %p98, %p99
    %p101 = scmp.ne.s32.totalorder %s89, %s90
    %p102 = scmp.eq.s32.totalorder %s17, 1
    %p103 = por %p101, %p102
    %p105 = scmp.ne.s32.totalorder %s90, %s104
    %p106 = scmp.eq.s32.totalorder %s17, 0
    %p107 = por %p105, %p106
    %s109 = sadd.s32 %s108, 1
    %p112 = scmp.eq.s32.totalorder %s11, 1
    %p113 = scmp.ne.s32.totalorder %s108, %s110
    %p114 = scmp.eq.s32.totalorder %s11, 0
    %p115 = por %p113, %p114
    %p116 = scmp.ne.s32.totalorder %s108, %s110
    %p117 = scmp.eq.s32.totalorder %s16, 1
    %p118 = por %p116, %p117
    %p119 = scmp.ne.s32.totalorder %s110, %s111
    %p120 = scmp.eq.s32.totalorder %s16, 0
    %p121 = por %p119, %p120
    %p122 = scmp.ne.s32.totalorder %s110, %s111
    %p123 = scmp.eq.s32.totalorder %s17, 1
    %p124 = por %p122, %p123
    %p126 = scmp.ne.s32.totalorder %s111, %s125
    %p127 = scmp.eq.s32.totalorder %s17, 0
    %p128 = por %p126, %p127
    %s129 = ssub.s32 %s11, %s18
    %p130 = scmp.eq.s32.totalorder %s129, 0
    %s132 = sadd.s32 %s131, 1
    %s133 = scalar_select %p130, %s131, %s132
    %p136 = pneg %p130
    %p137 = scmp.eq.s32.totalorder %s11, 1
    %p138 = por %p136, %p137
    %p139 = scmp.ne.s32.totalorder %s131, %s134
    %p140 = scmp.eq.s32.totalorder %s11, 0
    %p141 = por %p139, %p140
    %p142 = scmp.ne.s32.totalorder %s131, %s134
    %p143 = scmp.eq.s32.totalorder %s16, 1
    %p144 = por %p142, %p143
    %p145 = scmp.ne.s32.totalorder %s134, %s135
    %p146 = scmp.eq.s32.totalorder %s16, 0
    %p147 = por %p145, %p146
    %p148 = scmp.ne.s32.totalorder %s134, %s135
    %p149 = scmp.eq.s32.totalorder %s17, 1
    %p150 = por %p148, %p149
    %p152 = scmp.ne.s32.totalorder %s135, %s151
    %p153 = scmp.eq.s32.totalorder %s17, 0
    %p154 = por %p152, %p153
    %p155 = scmp.le.s32.totalorder 1, %s11
    %p156 = scmp.lt.s32.totalorder %s11, 3
    %p157 = pnand %p155, %p156
    %p158 = pneg %p157
    // Predicated region
    $region9: #{tpu_custom_call.1} parent=5 // pred_check
      _
    $region10: #{tpu_custom_call.1} parent=5 // pred_check_branch
      %160 = sbr.rel (%p157) target = $region12
    $region11: #{tpu_custom_call.1} parent=5 // pred_region
      %s161 = ssub.s32 %s11, 1
      // Predicated region
      $region13: #{tpu_custom_call.1} parent=11 // pred_check
        %p162 = pneg %p58
      $region14: #{tpu_custom_call.1} parent=11 // pred_check_branch
        %164 = sbr.rel (%p162) target = $region16
      $region15: #{tpu_custom_call.1} parent=11 // pred_region
        _
      $region16: #{tpu_custom_call.1} parent=11 // pred_fallthru
        _
      // Predicated region
      $region17: #{tpu_custom_call.1} parent=11 // pred_check
        %p165 = pneg %p79
      $region18: #{tpu_custom_call.1} parent=11 // pred_check_branch
        %167 = sbr.rel (%p165) target = $region20
      $region19: #{tpu_custom_call.1} parent=11 // pred_region
        _
      $region20: #{tpu_custom_call.1} parent=11 // pred_fallthru
        _
      // Predicated region
      $region21: #{tpu_custom_call.1} parent=11 // pred_check
        %p168 = pneg %p100
      $region22: #{tpu_custom_call.1} parent=11 // pred_check_branch
        %170 = sbr.rel (%p168) target = $region24
      $region23: #{tpu_custom_call.1} parent=11 // pred_region
        _
      $region24: #{tpu_custom_call.1} parent=11 // pred_fallthru
        _
      // Predicated region
      $region25: #{tpu_custom_call.1} parent=11 // pred_check
        %p171 = pneg %p121
      $region26: #{tpu_custom_call.1} parent=11 // pred_check_branch
        %173 = sbr.rel (%p171) target = $region28
      $region27: #{tpu_custom_call.1} parent=11 // pred_region
        _
      $region28: #{tpu_custom_call.1} parent=11 // pred_fallthru
        _
    $region12: #{tpu_custom_call.1} parent=5 // pred_fallthru
      _
    %p174 = scmp.lt.s32.totalorder %s11, 2
    // Predicated region
    $region29: #{tpu_custom_call.1} parent=5 // pred_check
      %p175 = pneg %p174
    $region30: #{tpu_custom_call.1} parent=5 // pred_check_branch
      %177 = sbr.rel (%p175) target = $region32
    $region31: #{tpu_custom_call.1} parent=5 // pred_region
      // Predicated region
      $region33: #{tpu_custom_call.1} parent=31 // pred_check
        %p178 = pneg %p31
      $region34: #{tpu_custom_call.1} parent=31 // pred_check_branch
        %180 = sbr.rel (%p178) target = $region36
      $region35: #{tpu_custom_call.1} parent=31 // pred_region
        %p181 = scmp.lt.s32.totalorder %s11, 1
        %s182 = scalar_select %p181, %s11, 1
        %s183 = smul.addr %s182, 32
        %s184 = smul.addr %s183, 4
        %s185 = scalar_lea.vmem %s0, %s184
      $region36: #{tpu_custom_call.1} parent=31 // pred_fallthru
        _
    $region32: #{tpu_custom_call.1} parent=5 // pred_fallthru
      _
    %p186 = scmp.le.s32.totalorder 1, %s11
    %p187 = scmp.lt.s32.totalorder %s11, 3
    %p188 = pnand %p186, %p187
    %p189 = pneg %p188
    // Predicated region
    $region37: #{tpu_custom_call.1} parent=5 // pred_check
      _
    $region38: #{tpu_custom_call.1} parent=5 // pred_check_branch
      %191 = sbr.rel (%p188) target = $region40
    $region39: #{tpu_custom_call.1} parent=5 // pred_region
      %s192 = ssub.s32 %s11, 1
      %p193 = scmp.lt.s32.totalorder %s16, 1
      %s194 = scalar_select %p193, %s16, 1
      %s195 = smul.addr %s194, 32
      %s196 = smul.addr %s195, 4
      %s197 = scalar_lea.vmem %s0, %s196
      %p198 = pneg %p37
      %p199 = pneg %p34
      %p200 = pneg %p58
      %p201 = pneg %p55
      %p202 = pneg %p79
      %p203 = pneg %p76
      %p204 = pneg %p100
      %p205 = pneg %p97
      %p206 = pneg %p121
      %p207 = pneg %p118
      %p208 = pneg %p147
      %p209 = pneg %p144
      %p210 = scmp.lt.s32.totalorder %s16, 1
      %s211 = scalar_select %p210, %s16, 1
      %s212 = smul.addr %s211, 32
      %s213 = smul.addr %s212, 4
      %s214 = scalar_lea.vmem %s5, %s213
      %p215 = scmp.lt.s32.totalorder %s16, 1
      %s216 = scalar_select %p215, %s16, 1
      %s217 = smul.addr %s216, 32
      %s218 = smul.addr %s217, 4
      %s219 = scalar_lea.vmem %s0, %s218
      %p220 = scmp.lt.s32.totalorder %s16, 1
      %s221 = scalar_select %p220, %s16, 1
      %s222 = smul.addr %s221, 32
      %s223 = smul.addr %s222, 4
      %s224 = scalar_lea.vmem %s5, %s223
      %v226 = vld [vmem:[%s219] sm:$0xf]
      %v227 = vld [vmem:[%s219 + $0x4] sm:$0xf]
      %v228 = vld [vmem:[%s219 + $0x8] sm:$0xf]
      %v229 = vld [vmem:[%s219 + $0xc] sm:$0xf]
      %v230 = vld [vmem:[%s219 + $0x10] sm:$0xf]
      %v231 = vld [vmem:[%s219 + $0x14] sm:$0xf]
      %v232 = vld [vmem:[%s219 + $0x18] sm:$0xf]
      %v233 = vld [vmem:[%s219 + $0x1c] sm:$0xf]
      %v234 = vld [vmem:[%s219 + $0x20] sm:$0xf]
      %v235 = vld [vmem:[%s219 + $0x24] sm:$0xf]
      %v236 = vld [vmem:[%s219 + $0x28] sm:$0xf]
      %v237 = vld [vmem:[%s219 + $0x2c] sm:$0xf]
      %v238 = vld [vmem:[%s219 + $0x30] sm:$0xf]
      %v239 = vld [vmem:[%s219 + $0x34] sm:$0xf]
      %v240 = vld [vmem:[%s219 + $0x38] sm:$0xf]
      %v241 = vld [vmem:[%s219 + $0x3c] sm:$0xf]
      %v242 = vld [vmem:[%s219 + $0x40] sm:$0xf]
      %v243 = vld [vmem:[%s219 + $0x44] sm:$0xf]
      %v244 = vld [vmem:[%s219 + $0x48] sm:$0xf]
      %v245 = vld [vmem:[%s219 + $0x4c] sm:$0xf]
      %v246 = vld [vmem:[%s219 + $0x50] sm:$0xf]
      %v247 = vld [vmem:[%s219 + $0x54] sm:$0xf]
      %v248 = vld [vmem:[%s219 + $0x58] sm:$0xf]
      %v249 = vld [vmem:[%s219 + $0x5c] sm:$0xf]
      %v250 = vld [vmem:[%s219 + $0x60] sm:$0xf]
      %v251 = vld [vmem:[%s219 + $0x64] sm:$0xf]
      %v252 = vld [vmem:[%s219 + $0x68] sm:$0xf]
      %v253 = vld [vmem:[%s219 + $0x6c] sm:$0xf]
      %v254 = vld [vmem:[%s219 + $0x70] sm:$0xf]
      %v255 = vld [vmem:[%s219 + $0x74] sm:$0xf]
      %v256 = vld [vmem:[%s219 + $0x78] sm:$0xf]
      %v257 = vld [vmem:[%s219 + $0x7c] sm:$0xf]
      %v258 = vunpack.c.l.bf16 %v226
      %v259 = vunpack.c.l.bf16 %v227
      %v260 = vunpack.c.l.bf16 %v228
      %v261 = vunpack.c.l.bf16 %v229
      %v262 = vunpack.c.l.bf16 %v230
      %v263 = vunpack.c.l.bf16 %v231
      %v264 = vunpack.c.l.bf16 %v232
      %v265 = vunpack.c.l.bf16 %v233
      %v266 = vunpack.c.l.bf16 %v234
      %v267 = vunpack.c.l.bf16 %v235
      %v268 = vunpack.c.l.bf16 %v236
      %v269 = vunpack.c.l.bf16 %v237
      %v270 = vunpack.c.l.bf16 %v238
      %v271 = vunpack.c.l.bf16 %v239
      %v272 = vunpack.c.l.bf16 %v240
      %v273 = vunpack.c.l.bf16 %v241
      %v274 = vunpack.c.l.bf16 %v242
      %v275 = vunpack.c.l.bf16 %v243
      %v276 = vunpack.c.l.bf16 %v244
      %v277 = vunpack.c.l.bf16 %v245
      %v278 = vunpack.c.l.bf16 %v246
      %v279 = vunpack.c.l.bf16 %v247
      %v280 = vunpack.c.l.bf16 %v248
      %v281 = vunpack.c.l.bf16 %v249
      %v282 = vunpack.c.l.bf16 %v250
      %v283 = vunpack.c.l.bf16 %v251
      %v284 = vunpack.c.l.bf16 %v252
      %v285 = vunpack.c.l.bf16 %v253
      %v286 = vunpack.c.l.bf16 %v254
      %v287 = vunpack.c.l.bf16 %v255
      %v288 = vunpack.c.l.bf16 %v256
      %v289 = vunpack.c.l.bf16 %v257
      %v290 = vlaneseq
      %v291 = vshrl.u32 %v290, 7
      %v292 = vadd.s32 %v291, 8
      %vm293 = vcmp.eq.s32.totalorder %v291, 0
      %vm294 = vcmp.eq.s32.totalorder %v292, 0
      %v295 = vrot.slane %v258, 7
      %v296 = vrot.slane %v260, 7
      %v297 = vrot.slane %v262, 7
      %v298 = vrot.slane %v264, 7
      %v299 = vrot.slane %v266, 7
      %v300 = vrot.slane %v268, 7
      %v301 = vrot.slane %v270, 7
      %v302 = vrot.slane %v272, 7
      %v303 = vrot.slane %v274, 7
      %v304 = vrot.slane %v276, 7
      %v305 = vrot.slane %v278, 7
      %v306 = vrot.slane %v280, 7
      %v307 = vrot.slane %v282, 7
      %v308 = vrot.slane %v284, 7
      %v309 = vrot.slane %v286, 7
      %v310 = vrot.slane %v288, 7
      %v311 = vrot.slane %v259, 7
      %v312 = vrot.slane %v261, 7
      %v313 = vrot.slane %v263, 7
      %v314 = vrot.slane %v265, 7
      %v315 = vrot.slane %v267, 7
      %v316 = vrot.slane %v269, 7
      %v317 = vrot.slane %v271, 7
      %v318 = vrot.slane %v273, 7
      %v319 = vrot.slane %v275, 7
      %v320 = vrot.slane %v277, 7
      %v321 = vrot.slane %v279, 7
      %v322 = vrot.slane %v281, 7
      %v323 = vrot.slane %v283, 7
      %v324 = vrot.slane %v285, 7
      %v325 = vrot.slane %v287, 7
      %v326 = vrot.slane %v289, 7
      %vm327 = vcmp.lt.s32.totalorder %v291, 1
      %v328 = vsel %vm327, %v295, %v311
      %v329 = vsel %vm327, %v296, %v312
      %v330 = vsel %vm327, %v297, %v313
      %v331 = vsel %vm327, %v298, %v314
      %v332 = vsel %vm327, %v299, %v315
      %v333 = vsel %vm327, %v300, %v316
      %v334 = vsel %vm327, %v301, %v317
      %v335 = vsel %vm327, %v302, %v318
      %v336 = vsel %vm327, %v303, %v319
      %v337 = vsel %vm327, %v304, %v320
      %v338 = vsel %vm327, %v305, %v321
      %v339 = vsel %vm327, %v306, %v322
      %v340 = vsel %vm327, %v307, %v323
      %v341 = vsel %vm327, %v308, %v324
      %v342 = vsel %vm327, %v309, %v325
      %v343 = vsel %vm327, %v310, %v326
      %v344 = vsel %vm327, %v311, %v295
      %v345 = vsel %vm327, %v312, %v296
      %v346 = vsel %vm327, %v313, %v297
      %v347 = vsel %vm327, %v314, %v298
      %v348 = vsel %vm327, %v315, %v299
      %v349 = vsel %vm327, %v316, %v300
      %v350 = vsel %vm327, %v317, %v301
      %v351 = vsel %vm327, %v318, %v302
      %v352 = vsel %vm327, %v319, %v303
      %v353 = vsel %vm327, %v320, %v304
      %v354 = vsel %vm327, %v321, %v305
      %v355 = vsel %vm327, %v322, %v306
      %v356 = vsel %vm327, %v323, %v307
      %v357 = vsel %vm327, %v324, %v308
      %v358 = vsel %vm327, %v325, %v309
      %v359 = vsel %vm327, %v326, %v310
      %v360 = vsel %vm293, 0.0, %v344
      %v361 = vsel %vm294, 0.0, %v328
      %v362 = vsel %vm293, 0.0, %v345
      %v363 = vsel %vm294, 0.0, %v329
      %v364 = vsel %vm293, 0.0, %v346
      %v365 = vsel %vm294, 0.0, %v330
      %v366 = vsel %vm293, 0.0, %v347
      %v367 = vsel %vm294, 0.0, %v331
      %v368 = vsel %vm293, 0.0, %v348
      %v369 = vsel %vm294, 0.0, %v332
      %v370 = vsel %vm293, 0.0, %v349
      %v371 = vsel %vm294, 0.0, %v333
      %v372 = vsel %vm293, 0.0, %v350
      %v373 = vsel %vm294, 0.0, %v334
      %v374 = vsel %vm293, 0.0, %v351
      %v375 = vsel %vm294, 0.0, %v335
      %v376 = vsel %vm293, 0.0, %v352
      %v377 = vsel %vm294, 0.0, %v336
      %v378 = vsel %vm293, 0.0, %v353
      %v379 = vsel %vm294, 0.0, %v337
      %v380 = vsel %vm293, 0.0, %v354
      %v381 = vsel %vm294, 0.0, %v338
      %v382 = vsel %vm293, 0.0, %v355
      %v383 = vsel %vm294, 0.0, %v339
      %v384 = vsel %vm293, 0.0, %v356
      %v385 = vsel %vm294, 0.0, %v340
      %v386 = vsel %vm293, 0.0, %v357
      %v387 = vsel %vm294, 0.0, %v341
      %v388 = vsel %vm293, 0.0, %v358
      %v389 = vsel %vm294, 0.0, %v342
      %v390 = vsel %vm293, 0.0, %v359
      %v391 = vsel %vm294, 0.0, %v343
      %vm392 = vcmp.eq.s32.totalorder %v291, 15
      %vm393 = vcmp.eq.s32.totalorder %v292, 15
      %v394 = vrot.slane %v258, 1
      %v395 = vrot.slane %v260, 1
      %v396 = vrot.slane %v262, 1
      %v397 = vrot.slane %v264, 1
      %v398 = vrot.slane %v266, 1
      %v399 = vrot.slane %v268, 1
      %v400 = vrot.slane %v270, 1
      %v401 = vrot.slane %v272, 1
      %v402 = vrot.slane %v274, 1
      %v403 = vrot.slane %v276, 1
      %v404 = vrot.slane %v278, 1
      %v405 = vrot.slane %v280, 1
      %v406 = vrot.slane %v282, 1
      %v407 = vrot.slane %v284, 1
      %v408 = vrot.slane %v286, 1
      %v409 = vrot.slane %v288, 1
      %v410 = vrot.slane %v259, 1
      %v411 = vrot.slane %v261, 1
      %v412 = vrot.slane %v263, 1
      %v413 = vrot.slane %v265, 1
      %v414 = vrot.slane %v267, 1
      %v415 = vrot.slane %v269, 1
      %v416 = vrot.slane %v271, 1
      %v417 = vrot.slane %v273, 1
      %v418 = vrot.slane %v275, 1
      %v419 = vrot.slane %v277, 1
      %v420 = vrot.slane %v279, 1
      %v421 = vrot.slane %v281, 1
      %v422 = vrot.slane %v283, 1
      %v423 = vrot.slane %v285, 1
      %v424 = vrot.slane %v287, 1
      %v425 = vrot.slane %v289, 1
      %vm426 = vcmp.lt.s32.totalorder %v291, 7
      %v427 = vsel %vm426, %v394, %v410
      %v428 = vsel %vm426, %v395, %v411
      %v429 = vsel %vm426, %v396, %v412
      %v430 = vsel %vm426, %v397, %v413
      %v431 = vsel %vm426, %v398, %v414
      %v432 = vsel %vm426, %v399, %v415
      %v433 = vsel %vm426, %v400, %v416
      %v434 = vsel %vm426, %v401, %v417
      %v435 = vsel %vm426, %v402, %v418
      %v436 = vsel %vm426, %v403, %v419
      %v437 = vsel %vm426, %v404, %v420
      %v438 = vsel %vm426, %v405, %v421
      %v439 = vsel %vm426, %v406, %v422
      %v440 = vsel %vm426, %v407, %v423
      %v441 = vsel %vm426, %v408, %v424
      %v442 = vsel %vm426, %v409, %v425
      %v443 = vsel %vm426, %v410, %v394
      %v444 = vsel %vm426, %v411, %v395
      %v445 = vsel %vm426, %v412, %v396
      %v446 = vsel %vm426, %v413, %v397
      %v447 = vsel %vm426, %v414, %v398
      %v448 = vsel %vm426, %v415, %v399
      %v449 = vsel %vm426, %v416, %v400
      %v450 = vsel %vm426, %v417, %v401
      %v451 = vsel %vm426, %v418, %v402
      %v452 = vsel %vm426, %v419, %v403
      %v453 = vsel %vm426, %v420, %v404
      %v454 = vsel %vm426, %v421, %v405
      %v455 = vsel %vm426, %v422, %v406
      %v456 = vsel %vm426, %v423, %v407
      %v457 = vsel %vm426, %v424, %v408
      %v458 = vsel %vm426, %v425, %v409
      %v459 = vsel %vm392, 0.0, %v427
      %v460 = vsel %vm393, 0.0, %v443
      %v461 = vsel %vm392, 0.0, %v428
      %v462 = vsel %vm393, 0.0, %v444
      %v463 = vsel %vm392, 0.0, %v429
      %v464 = vsel %vm393, 0.0, %v445
      %v465 = vsel %vm392, 0.0, %v430
      %v466 = vsel %vm393, 0.0, %v446
      %v467 = vsel %vm392, 0.0, %v431
      %v468 = vsel %vm393, 0.0, %v447
      %v469 = vsel %vm392, 0.0, %v432
      %v470 = vsel %vm393, 0.0, %v448
      %v471 = vsel %vm392, 0.0, %v433
      %v472 = vsel %vm393, 0.0, %v449
      %v473 = vsel %vm392, 0.0, %v434
      %v474 = vsel %vm393, 0.0, %v450
      %v475 = vsel %vm392, 0.0, %v435
      %v476 = vsel %vm393, 0.0, %v451
      %v477 = vsel %vm392, 0.0, %v436
      %v478 = vsel %vm393, 0.0, %v452
      %v479 = vsel %vm392, 0.0, %v437
      %v480 = vsel %vm393, 0.0, %v453
      %v481 = vsel %vm392, 0.0, %v438
      %v482 = vsel %vm393, 0.0, %v454
      %v483 = vsel %vm392, 0.0, %v439
      %v484 = vsel %vm393, 0.0, %v455
      %v485 = vsel %vm392, 0.0, %v440
      %v486 = vsel %vm393, 0.0, %v456
      %v487 = vsel %vm392, 0.0, %v441
      %v488 = vsel %vm393, 0.0, %v457
      %v489 = vsel %vm392, 0.0, %v442
      %v490 = vsel %vm393, 0.0, %v458
      %v491 = vld [vmem:[%s1] sm:$0x7]
      %v492 = vld [vmem:[%s1 + $0x4] sm:$0x7]
      %v493 = vld [vmem:[%s1 + $0x8] sm:$0x7]
      %v494 = vlaneseq
      %v495 = vshrl.u32 %v494, 7
      %v496 = vsub.s32 0, %v495
      %v497 = vrot.slane %v491, %v496
      %v498 = vmul.f32 %v497, 0.0
      %v499 = vmul.f32 %v360, %v497
      %v500 = vmul.f32 %v361, %v497
      %v501 = vmul.f32 %v362, %v497
      %v502 = vmul.f32 %v363, %v497
      %v503 = vmul.f32 %v364, %v497
      %v504 = vmul.f32 %v365, %v497
      %v505 = vmul.f32 %v366, %v497
      %v506 = vmul.f32 %v367, %v497
      %v507 = vmul.f32 %v368, %v497
      %v508 = vmul.f32 %v369, %v497
      %v509 = vmul.f32 %v370, %v497
      %v510 = vmul.f32 %v371, %v497
      %v511 = vmul.f32 %v372, %v497
      %v512 = vmul.f32 %v373, %v497
      %v513 = vmul.f32 %v374, %v497
      %v514 = vmul.f32 %v375, %v497
      %v515 = vmul.f32 %v376, %v497
      %v516 = vmul.f32 %v377, %v497
      %v517 = vmul.f32 %v378, %v497
      %v518 = vmul.f32 %v379, %v497
      %v519 = vmul.f32 %v380, %v497
      %v520 = vmul.f32 %v381, %v497
      %v521 = vmul.f32 %v382, %v497
      %v522 = vmul.f32 %v383, %v497
      %v523 = vmul.f32 %v384, %v497
      %v524 = vmul.f32 %v385, %v497
      %v525 = vmul.f32 %v386, %v497
      %v526 = vmul.f32 %v387, %v497
      %v527 = vmul.f32 %v388, %v497
      %v528 = vmul.f32 %v389, %v497
      %v529 = vlaneseq
      %v530 = vshrl.u32 %v529, 7
      %v531 = vsub.s32 0, %v530
      %v532 = vrot.slane %v492, %v531
      %v533 = vmul.f32 %v360, %v532
      %v534 = vmul.f32 %v361, %v532
      %v535 = vmul.f32 %v362, %v532
      %v536 = vmul.f32 %v363, %v532
      %v537 = vmul.f32 %v364, %v532
      %v538 = vmul.f32 %v365, %v532
      %v539 = vmul.f32 %v366, %v532
      %v540 = vmul.f32 %v367, %v532
      %v541 = vmul.f32 %v368, %v532
      %v542 = vmul.f32 %v369, %v532
      %v543 = vmul.f32 %v370, %v532
      %v544 = vmul.f32 %v371, %v532
      %v545 = vmul.f32 %v372, %v532
      %v546 = vmul.f32 %v373, %v532
      %v547 = vmul.f32 %v374, %v532
      %v548 = vmul.f32 %v375, %v532
      %v549 = vmul.f32 %v376, %v532
      %v550 = vmul.f32 %v377, %v532
      %v551 = vmul.f32 %v378, %v532
      %v552 = vmul.f32 %v379, %v532
      %v553 = vmul.f32 %v380, %v532
      %v554 = vmul.f32 %v381, %v532
      %v555 = vmul.f32 %v382, %v532
      %v556 = vmul.f32 %v383, %v532
      %v557 = vmul.f32 %v384, %v532
      %v558 = vmul.f32 %v385, %v532
      %v559 = vmul.f32 %v386, %v532
      %v560 = vmul.f32 %v387, %v532
      %v561 = vmul.f32 %v388, %v532
      %v562 = vmul.f32 %v389, %v532
      %v563 = vmul.f32 %v390, %v532
      %v564 = vmul.f32 %v391, %v532
      %v565 = vadd.f32 %v498, %v533
      %v566 = vadd.f32 %v498, %v534
      %v567 = vadd.f32 %v499, %v535
      %v568 = vadd.f32 %v500, %v536
      %v569 = vadd.f32 %v501, %v537
      %v570 = vadd.f32 %v502, %v538
      %v571 = vadd.f32 %v503, %v539
      %v572 = vadd.f32 %v504, %v540
      %v573 = vadd.f32 %v505, %v541
      %v574 = vadd.f32 %v506, %v542
      %v575 = vadd.f32 %v507, %v543
      %v576 = vadd.f32 %v508, %v544
      %v577 = vadd.f32 %v509, %v545
      %v578 = vadd.f32 %v510, %v546
      %v579 = vadd.f32 %v511, %v547
      %v580 = vadd.f32 %v512, %v548
      %v581 = vadd.f32 %v513, %v549
      %v582 = vadd.f32 %v514, %v550
      %v583 = vadd.f32 %v515, %v551
      %v584 = vadd.f32 %v516, %v552
      %v585 = vadd.f32 %v517, %v553
      %v586 = vadd.f32 %v518, %v554
      %v587 = vadd.f32 %v519, %v555
      %v588 = vadd.f32 %v520, %v556
      %v589 = vadd.f32 %v521, %v557
      %v590 = vadd.f32 %v522, %v558
      %v591 = vadd.f32 %v523, %v559
      %v592 = vadd.f32 %v524, %v560
      %v593 = vadd.f32 %v525, %v561
      %v594 = vadd.f32 %v526, %v562
      %v595 = vadd.f32 %v527, %v563
      %v596 = vadd.f32 %v528, %v564
      %v597 = vlaneseq
      %v598 = vshrl.u32 %v597, 7
      %v599 = vsub.s32 0, %v598
      %v600 = vrot.slane %v493, %v599
      %v601 = vmul.f32 %v362, %v600
      %v602 = vmul.f32 %v363, %v600
      %v603 = vmul.f32 %v364, %v600
      %v604 = vmul.f32 %v365, %v600
      %v605 = vmul.f32 %v366, %v600
      %v606 = vmul.f32 %v367, %v600
      %v607 = vmul.f32 %v368, %v600
      %v608 = vmul.f32 %v369, %v600
      %v609 = vmul.f32 %v370, %v600
      %v610 = vmul.f32 %v371, %v600
      %v611 = vmul.f32 %v372, %v600
      %v612 = vmul.f32 %v373, %v600
      %v613 = vmul.f32 %v374, %v600
      %v614 = vmul.f32 %v375, %v600
      %v615 = vmul.f32 %v376, %v600
      %v616 = vmul.f32 %v377, %v600
      %v617 = vmul.f32 %v378, %v600
      %v618 = vmul.f32 %v379, %v600
      %v619 = vmul.f32 %v380, %v600
      %v620 = vmul.f32 %v381, %v600
      %v621 = vmul.f32 %v382, %v600
      %v622 = vmul.f32 %v383, %v600
      %v623 = vmul.f32 %v384, %v600
      %v624 = vmul.f32 %v385, %v600
      %v625 = vmul.f32 %v386, %v600
      %v626 = vmul.f32 %v387, %v600
      %v627 = vmul.f32 %v388, %v600
      %v628 = vmul.f32 %v389, %v600
      %v629 = vmul.f32 %v390, %v600
      %v630 = vmul.f32 %v391, %v600
      %v631 = vmul.f32 %v600, 0.0
      %v632 = vadd.f32 %v565, %v601
      %v633 = vadd.f32 %v566, %v602
      %v634 = vadd.f32 %v567, %v603
      %v635 = vadd.f32 %v568, %v604
      %v636 = vadd.f32 %v569, %v605
      %v637 = vadd.f32 %v570, %v606
      %v638 = vadd.f32 %v571, %v607
      %v639 = vadd.f32 %v572, %v608
      %v640 = vadd.f32 %v573, %v609
      %v641 = vadd.f32 %v574, %v610
      %v642 = vadd.f32 %v575, %v611
      %v643 = vadd.f32 %v576, %v612
      %v644 = vadd.f32 %v577, %v613
      %v645 = vadd.f32 %v578, %v614
      %v646 = vadd.f32 %v579, %v615
      %v647 = vadd.f32 %v580, %v616
      %v648 = vadd.f32 %v581, %v617
      %v649 = vadd.f32 %v582, %v618
      %v650 = vadd.f32 %v583, %v619
      %v651 = vadd.f32 %v584, %v620
      %v652 = vadd.f32 %v585, %v621
      %v653 = vadd.f32 %v586, %v622
      %v654 = vadd.f32 %v587, %v623
      %v655 = vadd.f32 %v588, %v624
      %v656 = vadd.f32 %v589, %v625
      %v657 = vadd.f32 %v590, %v626
      %v658 = vadd.f32 %v591, %v627
      %v659 = vadd.f32 %v592, %v628
      %v660 = vadd.f32 %v593, %v629
      %v661 = vadd.f32 %v594, %v630
      %v662 = vadd.f32 %v595, %v631
      %v663 = vadd.f32 %v596, %v631
      %v664 = vlaneseq
      %v665 = vshrl.u32 %v664, 7
      %v666 = vsub.s32 1, %v665
      %v667 = vrot.slane %v491, %v666
      %v668 = vmul.f32 %v667, 0.0
      %v669 = vmul.f32 %v258, %v667
      %v670 = vmul.f32 %v259, %v667
      %v671 = vmul.f32 %v260, %v667
      %v672 = vmul.f32 %v261, %v667
      %v673 = vmul.f32 %v262, %v667
      %v674 = vmul.f32 %v263, %v667
      %v675 = vmul.f32 %v264, %v667
      %v676 = vmul.f32 %v265, %v667
      %v677 = vmul.f32 %v266, %v667
      %v678 = vmul.f32 %v267, %v667
      %v679 = vmul.f32 %v268, %v667
      %v680 = vmul.f32 %v269, %v667
      %v681 = vmul.f32 %v270, %v667
      %v682 = vmul.f32 %v271, %v667
      %v683 = vmul.f32 %v272, %v667
      %v684 = vmul.f32 %v273, %v667
      %v685 = vmul.f32 %v274, %v667
      %v686 = vmul.f32 %v275, %v667
      %v687 = vmul.f32 %v276, %v667
      %v688 = vmul.f32 %v277, %v667
      %v689 = vmul.f32 %v278, %v667
      %v690 = vmul.f32 %v279, %v667
      %v691 = vmul.f32 %v280, %v667
      %v692 = vmul.f32 %v281, %v667
      %v693 = vmul.f32 %v282, %v667
      %v694 = vmul.f32 %v283, %v667
      %v695 = vmul.f32 %v284, %v667
      %v696 = vmul.f32 %v285, %v667
      %v697 = vmul.f32 %v286, %v667
      %v698 = vmul.f32 %v287, %v667
      %v699 = vadd.f32 %v632, %v668
      %v700 = vadd.f32 %v633, %v668
      %v701 = vadd.f32 %v634, %v669
      %v702 = vadd.f32 %v635, %v670
      %v703 = vadd.f32 %v636, %v671
      %v704 = vadd.f32 %v637, %v672
      %v705 = vadd.f32 %v638, %v673
      %v706 = vadd.f32 %v639, %v674
      %v707 = vadd.f32 %v640, %v675
      %v708 = vadd.f32 %v641, %v676
      %v709 = vadd.f32 %v642, %v677
      %v710 = vadd.f32 %v643, %v678
      %v711 = vadd.f32 %v644, %v679
      %v712 = vadd.f32 %v645, %v680
      %v713 = vadd.f32 %v646, %v681
      %v714 = vadd.f32 %v647, %v682
      %v715 = vadd.f32 %v648, %v683
      %v716 = vadd.f32 %v649, %v684
      %v717 = vadd.f32 %v650, %v685
      %v718 = vadd.f32 %v651, %v686
      %v719 = vadd.f32 %v652, %v687
      %v720 = vadd.f32 %v653, %v688
      %v721 = vadd.f32 %v654, %v689
      %v722 = vadd.f32 %v655, %v690
      %v723 = vadd.f32 %v656, %v691
      %v724 = vadd.f32 %v657, %v692
      %v725 = vadd.f32 %v658, %v693
      %v726 = vadd.f32 %v659, %v694
      %v727 = vadd.f32 %v660, %v695
      %v728 = vadd.f32 %v661, %v696
      %v729 = vadd.f32 %v662, %v697
      %v730 = vadd.f32 %v663, %v698
      %v731 = vlaneseq
      %v732 = vshrl.u32 %v731, 7
      %v733 = vsub.s32 1, %v732
      %v734 = vrot.slane %v492, %v733
      %v735 = vmul.f32 %v258, %v734
      %v736 = vmul.f32 %v259, %v734
      %v737 = vmul.f32 %v260, %v734
      %v738 = vmul.f32 %v261, %v734
      %v739 = vmul.f32 %v262, %v734
      %v740 = vmul.f32 %v263, %v734
      %v741 = vmul.f32 %v264, %v734
      %v742 = vmul.f32 %v265, %v734
      %v743 = vmul.f32 %v266, %v734
      %v744 = vmul.f32 %v267, %v734
      %v745 = vmul.f32 %v268, %v734
      %v746 = vmul.f32 %v269, %v734
      %v747 = vmul.f32 %v270, %v734
      %v748 = vmul.f32 %v271, %v734
      %v749 = vmul.f32 %v272, %v734
      %v750 = vmul.f32 %v273, %v734
      %v751 = vmul.f32 %v274, %v734
      %v752 = vmul.f32 %v275, %v734
      %v753 = vmul.f32 %v276, %v734
      %v754 = vmul.f32 %v277, %v734
      %v755 = vmul.f32 %v278, %v734
      %v756 = vmul.f32 %v279, %v734
      %v757 = vmul.f32 %v280, %v734
      %v758 = vmul.f32 %v281, %v734
      %v759 = vmul.f32 %v282, %v734
      %v760 = vmul.f32 %v283, %v734
      %v761 = vmul.f32 %v284, %v734
      %v762 = vmul.f32 %v285, %v734
      %v763 = vmul.f32 %v286, %v734
      %v764 = vmul.f32 %v287, %v734
      %v765 = vmul.f32 %v288, %v734
      %v766 = vmul.f32 %v289, %v734
      %v767 = vadd.f32 %v699, %v735
      %v768 = vadd.f32 %v700, %v736
      %v769 = vadd.f32 %v701, %v737
      %v770 = vadd.f32 %v702, %v738
      %v771 = vadd.f32 %v703, %v739
      %v772 = vadd.f32 %v704, %v740
      %v773 = vadd.f32 %v705, %v741
      %v774 = vadd.f32 %v706, %v742
      %v775 = vadd.f32 %v707, %v743
      %v776 = vadd.f32 %v708, %v744
      %v777 = vadd.f32 %v709, %v745
      %v778 = vadd.f32 %v710, %v746
      %v779 = vadd.f32 %v711, %v747
      %v780 = vadd.f32 %v712, %v748
      %v781 = vadd.f32 %v713, %v749
      %v782 = vadd.f32 %v714, %v750
      %v783 = vadd.f32 %v715, %v751
      %v784 = vadd.f32 %v716, %v752
      %v785 = vadd.f32 %v717, %v753
      %v786 = vadd.f32 %v718, %v754
      %v787 = vadd.f32 %v719, %v755
      %v788 = vadd.f32 %v720, %v756
      %v789 = vadd.f32 %v721, %v757
      %v790 = vadd.f32 %v722, %v758
      %v791 = vadd.f32 %v723, %v759
      %v792 = vadd.f32 %v724, %v760
      %v793 = vadd.f32 %v725, %v761
      %v794 = vadd.f32 %v726, %v762
      %v795 = vadd.f32 %v727, %v763
      %v796 = vadd.f32 %v728, %v764
      %v797 = vadd.f32 %v729, %v765
      %v798 = vadd.f32 %v730, %v766
      %v799 = vlaneseq
      %v800 = vshrl.u32 %v799, 7
      %v801 = vsub.s32 1, %v800
      %v802 = vrot.slane %v493, %v801
      %v803 = vmul.f32 %v260, %v802
      %v804 = vmul.f32 %v261, %v802
      %v805 = vmul.f32 %v262, %v802
      %v806 = vmul.f32 %v263, %v802
      %v807 = vmul.f32 %v264, %v802
      %v808 = vmul.f32 %v265, %v802
      %v809 = vmul.f32 %v266, %v802
      %v810 = vmul.f32 %v267, %v802
      %v811 = vmul.f32 %v268, %v802
      %v812 = vmul.f32 %v269, %v802
      %v813 = vmul.f32 %v270, %v802
      %v814 = vmul.f32 %v271, %v802
      %v815 = vmul.f32 %v272, %v802
      %v816 = vmul.f32 %v273, %v802
      %v817 = vmul.f32 %v274, %v802
      %v818 = vmul.f32 %v275, %v802
      %v819 = vmul.f32 %v276, %v802
      %v820 = vmul.f32 %v277, %v802
      %v821 = vmul.f32 %v278, %v802
      %v822 = vmul.f32 %v279, %v802
      %v823 = vmul.f32 %v280, %v802
      %v824 = vmul.f32 %v281, %v802
      %v825 = vmul.f32 %v282, %v802
      %v826 = vmul.f32 %v283, %v802
      %v827 = vmul.f32 %v284, %v802
      %v828 = vmul.f32 %v285, %v802
      %v829 = vmul.f32 %v286, %v802
      %v830 = vmul.f32 %v287, %v802
      %v831 = vmul.f32 %v288, %v802
      %v832 = vmul.f32 %v289, %v802
      %v833 = vmul.f32 %v802, 0.0
      %v834 = vadd.f32 %v767, %v803
      %v835 = vadd.f32 %v768, %v804
      %v836 = vadd.f32 %v769, %v805
      %v837 = vadd.f32 %v770, %v806
      %v838 = vadd.f32 %v771, %v807
      %v839 = vadd.f32 %v772, %v808
      %v840 = vadd.f32 %v773, %v809
      %v841 = vadd.f32 %v774, %v810
      %v842 = vadd.f32 %v775, %v811
      %v843 = vadd.f32 %v776, %v812
      %v844 = vadd.f32 %v777, %v813
      %v845 = vadd.f32 %v778, %v814
      %v846 = vadd.f32 %v779, %v815
      %v847 = vadd.f32 %v780, %v816
      %v848 = vadd.f32 %v781, %v817
      %v849 = vadd.f32 %v782, %v818
      %v850 = vadd.f32 %v783, %v819
      %v851 = vadd.f32 %v784, %v820
      %v852 = vadd.f32 %v785, %v821
      %v853 = vadd.f32 %v786, %v822
      %v854 = vadd.f32 %v787, %v823
      %v855 = vadd.f32 %v788, %v824
      %v856 = vadd.f32 %v789, %v825
      %v857 = vadd.f32 %v790, %v826
      %v858 = vadd.f32 %v791, %v827
      %v859 = vadd.f32 %v792, %v828
      %v860 = vadd.f32 %v793, %v829
      %v861 = vadd.f32 %v794, %v830
      %v862 = vadd.f32 %v795, %v831
      %v863 = vadd.f32 %v796, %v832
      %v864 = vadd.f32 %v797, %v833
      %v865 = vadd.f32 %v798, %v833
      %v866 = vlaneseq
      %v867 = vshrl.u32 %v866, 7
      %v868 = vsub.s32 2, %v867
      %v869 = vrot.slane %v491, %v868
      %v870 = vmul.f32 %v869, 0.0
      %v871 = vmul.f32 %v459, %v869
      %v872 = vmul.f32 %v460, %v869
      %v873 = vmul.f32 %v461, %v869
      %v874 = vmul.f32 %v462, %v869
      %v875 = vmul.f32 %v463, %v869
      %v876 = vmul.f32 %v464, %v869
      %v877 = vmul.f32 %v465, %v869
      %v878 = vmul.f32 %v466, %v869
      %v879 = vmul.f32 %v467, %v869
      %v880 = vmul.f32 %v468, %v869
      %v881 = vmul.f32 %v469, %v869
      %v882 = vmul.f32 %v470, %v869
      %v883 = vmul.f32 %v471, %v869
      %v884 = vmul.f32 %v472, %v869
      %v885 = vmul.f32 %v473, %v869
      %v886 = vmul.f32 %v474, %v869
      %v887 = vmul.f32 %v475, %v869
      %v888 = vmul.f32 %v476, %v869
      %v889 = vmul.f32 %v477, %v869
      %v890 = vmul.f32 %v478, %v869
      %v891 = vmul.f32 %v479, %v869
      %v892 = vmul.f32 %v480, %v869
      %v893 = vmul.f32 %v481, %v869
      %v894 = vmul.f32 %v482, %v869
      %v895 = vmul.f32 %v483, %v869
      %v896 = vmul.f32 %v484, %v869
      %v897 = vmul.f32 %v485, %v869
      %v898 = vmul.f32 %v486, %v869
      %v899 = vmul.f32 %v487, %v869
      %v900 = vmul.f32 %v488, %v869
      %v901 = vadd.f32 %v834, %v870
      %v902 = vadd.f32 %v835, %v870
      %v903 = vadd.f32 %v836, %v871
      %v904 = vadd.f32 %v837, %v872
      %v905 = vadd.f32 %v838, %v873
      %v906 = vadd.f32 %v839, %v874
      %v907 = vadd.f32 %v840, %v875
      %v908 = vadd.f32 %v841, %v876
      %v909 = vadd.f32 %v842, %v877
      %v910 = vadd.f32 %v843, %v878
      %v911 = vadd.f32 %v844, %v879
      %v912 = vadd.f32 %v845, %v880
      %v913 = vadd.f32 %v846, %v881
      %v914 = vadd.f32 %v847, %v882
      %v915 = vadd.f32 %v848, %v883
      %v916 = vadd.f32 %v849, %v884
      %v917 = vadd.f32 %v850, %v885
      %v918 = vadd.f32 %v851, %v886
      %v919 = vadd.f32 %v852, %v887
      %v920 = vadd.f32 %v853, %v888
      %v921 = vadd.f32 %v854, %v889
      %v922 = vadd.f32 %v855, %v890
      %v923 = vadd.f32 %v856, %v891
      %v924 = vadd.f32 %v857, %v892
      %v925 = vadd.f32 %v858, %v893
      %v926 = vadd.f32 %v859, %v894
      %v927 = vadd.f32 %v860, %v895
      %v928 = vadd.f32 %v861, %v896
      %v929 = vadd.f32 %v862, %v897
      %v930 = vadd.f32 %v863, %v898
      %v931 = vadd.f32 %v864, %v899
      %v932 = vadd.f32 %v865, %v900
      %v933 = vlaneseq
      %v934 = vshrl.u32 %v933, 7
      %v935 = vsub.s32 2, %v934
      %v936 = vrot.slane %v492, %v935
      %v937 = vmul.f32 %v459, %v936
      %v938 = vmul.f32 %v460, %v936
      %v939 = vmul.f32 %v461, %v936
      %v940 = vmul.f32 %v462, %v936
      %v941 = vmul.f32 %v463, %v936
      %v942 = vmul.f32 %v464, %v936
      %v943 = vmul.f32 %v465, %v936
      %v944 = vmul.f32 %v466, %v936
      %v945 = vmul.f32 %v467, %v936
      %v946 = vmul.f32 %v468, %v936
      %v947 = vmul.f32 %v469, %v936
      %v948 = vmul.f32 %v470, %v936
      %v949 = vmul.f32 %v471, %v936
      %v950 = vmul.f32 %v472, %v936
      %v951 = vmul.f32 %v473, %v936
      %v952 = vmul.f32 %v474, %v936
      %v953 = vmul.f32 %v475, %v936
      %v954 = vmul.f32 %v476, %v936
      %v955 = vmul.f32 %v477, %v936
      %v956 = vmul.f32 %v478, %v936
      %v957 = vmul.f32 %v479, %v936
      %v958 = vmul.f32 %v480, %v936
      %v959 = vmul.f32 %v481, %v936
      %v960 = vmul.f32 %v482, %v936
      %v961 = vmul.f32 %v483, %v936
      %v962 = vmul.f32 %v484, %v936
      %v963 = vmul.f32 %v485, %v936
      %v964 = vmul.f32 %v486, %v936
      %v965 = vmul.f32 %v487, %v936
      %v966 = vmul.f32 %v488, %v936
      %v967 = vmul.f32 %v489, %v936
      %v968 = vmul.f32 %v490, %v936
      %v969 = vadd.f32 %v901, %v937
      %v970 = vadd.f32 %v902, %v938
      %v971 = vadd.f32 %v903, %v939
      %v972 = vadd.f32 %v904, %v940
      %v973 = vadd.f32 %v905, %v941
      %v974 = vadd.f32 %v906, %v942
      %v975 = vadd.f32 %v907, %v943
      %v976 = vadd.f32 %v908, %v944
      %v977 = vadd.f32 %v909, %v945
      %v978 = vadd.f32 %v910, %v946
      %v979 = vadd.f32 %v911, %v947
      %v980 = vadd.f32 %v912, %v948
      %v981 = vadd.f32 %v913, %v949
      %v982 = vadd.f32 %v914, %v950
      %v983 = vadd.f32 %v915, %v951
      %v984 = vadd.f32 %v916, %v952
      %v985 = vadd.f32 %v917, %v953
      %v986 = vadd.f32 %v918, %v954
      %v987 = vadd.f32 %v919, %v955
      %v988 = vadd.f32 %v920, %v956
      %v989 = vadd.f32 %v921, %v957
      %v990 = vadd.f32 %v922, %v958
      %v991 = vadd.f32 %v923, %v959
      %v992 = vadd.f32 %v924, %v960
      %v993 = vadd.f32 %v925, %v961
      %v994 = vadd.f32 %v926, %v962
      %v995 = vadd.f32 %v927, %v963
      %v996 = vadd.f32 %v928, %v964
      %v997 = vadd.f32 %v929, %v965
      %v998 = vadd.f32 %v930, %v966
      %v999 = vadd.f32 %v931, %v967
      %v1000 = vadd.f32 %v932, %v968
      %v1001 = vlaneseq
      %v1002 = vshrl.u32 %v1001, 7
      %v1003 = vsub.s32 2, %v1002
      %v1004 = vrot.slane %v493, %v1003
      %v1005 = vmul.f32 %v461, %v1004
      %v1006 = vmul.f32 %v462, %v1004
      %v1007 = vmul.f32 %v463, %v1004
      %v1008 = vmul.f32 %v464, %v1004
      %v1009 = vmul.f32 %v465, %v1004
      %v1010 = vmul.f32 %v466, %v1004
      %v1011 = vmul.f32 %v467, %v1004
      %v1012 = vmul.f32 %v468, %v1004
      %v1013 = vmul.f32 %v469, %v1004
      %v1014 = vmul.f32 %v470, %v1004
      %v1015 = vmul.f32 %v471, %v1004
      %v1016 = vmul.f32 %v472, %v1004
      %v1017 = vmul.f32 %v473, %v1004
      %v1018 = vmul.f32 %v474, %v1004
      %v1019 = vmul.f32 %v475, %v1004
      %v1020 = vmul.f32 %v476, %v1004
      %v1021 = vmul.f32 %v477, %v1004
      %v1022 = vmul.f32 %v478, %v1004
      %v1023 = vmul.f32 %v479, %v1004
      %v1024 = vmul.f32 %v480, %v1004
      %v1025 = vmul.f32 %v481, %v1004
      %v1026 = vmul.f32 %v482, %v1004
      %v1027 = vmul.f32 %v483, %v1004
      %v1028 = vmul.f32 %v484, %v1004
      %v1029 = vmul.f32 %v485, %v1004
      %v1030 = vmul.f32 %v486, %v1004
      %v1031 = vmul.f32 %v487, %v1004
      %v1032 = vmul.f32 %v488, %v1004
      %v1033 = vmul.f32 %v489, %v1004
      %v1034 = vmul.f32 %v490, %v1004
      %v1035 = vmul.f32 %v1004, 0.0
      %v1036 = vadd.f32 %v969, %v1005
      %v1037 = vadd.f32 %v970, %v1006
      %v1038 = vadd.f32 %v971, %v1007
      %v1039 = vadd.f32 %v972, %v1008
      %v1040 = vadd.f32 %v973, %v1009
      %v1041 = vadd.f32 %v974, %v1010
      %v1042 = vadd.f32 %v975, %v1011
      %v1043 = vadd.f32 %v976, %v1012
      %v1044 = vadd.f32 %v977, %v1013
      %v1045 = vadd.f32 %v978, %v1014
      %v1046 = vadd.f32 %v979, %v1015
      %v1047 = vadd.f32 %v980, %v1016
      %v1048 = vadd.f32 %v981, %v1017
      %v1049 = vadd.f32 %v982, %v1018
      %v1050 = vadd.f32 %v983, %v1019
      %v1051 = vadd.f32 %v984, %v1020
      %v1052 = vadd.f32 %v985, %v1021
      %v1053 = vadd.f32 %v986, %v1022
      %v1054 = vadd.f32 %v987, %v1023
      %v1055 = vadd.f32 %v988, %v1024
      %v1056 = vadd.f32 %v989, %v1025
      %v1057 = vadd.f32 %v990, %v1026
      %v1058 = vadd.f32 %v991, %v1027
      %v1059 = vadd.f32 %v992, %v1028
      %v1060 = vadd.f32 %v993, %v1029
      %v1061 = vadd.f32 %v994, %v1030
      %v1062 = vadd.f32 %v995, %v1031
      %v1063 = vadd.f32 %v996, %v1032
      %v1064 = vadd.f32 %v997, %v1033
      %v1065 = vadd.f32 %v998, %v1034
      %v1066 = vadd.f32 %v999, %v1035
      %v1067 = vadd.f32 %v1000, %v1035
      %v1068 = vld [vmem:[%s2] sm:$0x1]
      %v1070 = vlaneseq
      %v1071 = vshrl.u32 %v1070, 7
      %v1072 = vsub.s32 0, %v1071
      %v1073 = vrot.slane %v1068, %v1072
      %v1075 = vadd.f32 %v1036, %v1073
      %v1076 = vadd.f32 %v1037, %v1073
      %v1077 = vadd.f32 %v1038, %v1073
      %v1078 = vadd.f32 %v1039, %v1073
      %v1079 = vadd.f32 %v1040, %v1073
      %v1080 = vadd.f32 %v1041, %v1073
      %v1081 = vadd.f32 %v1042, %v1073
      %v1082 = vadd.f32 %v1043, %v1073
      %v1083 = vadd.f32 %v1044, %v1073
      %v1084 = vadd.f32 %v1045, %v1073
      %v1085 = vadd.f32 %v1046, %v1073
      %v1086 = vadd.f32 %v1047, %v1073
      %v1087 = vadd.f32 %v1048, %v1073
      %v1088 = vadd.f32 %v1049, %v1073
      %v1089 = vadd.f32 %v1050, %v1073
      %v1090 = vadd.f32 %v1051, %v1073
      %v1091 = vadd.f32 %v1052, %v1073
      %v1092 = vadd.f32 %v1053, %v1073
      %v1093 = vadd.f32 %v1054, %v1073
      %v1094 = vadd.f32 %v1055, %v1073
      %v1095 = vadd.f32 %v1056, %v1073
      %v1096 = vadd.f32 %v1057, %v1073
      %v1097 = vadd.f32 %v1058, %v1073
      %v1098 = vadd.f32 %v1059, %v1073
      %v1099 = vadd.f32 %v1060, %v1073
      %v1100 = vadd.f32 %v1061, %v1073
      %v1101 = vadd.f32 %v1062, %v1073
      %v1102 = vadd.f32 %v1063, %v1073
      %v1103 = vadd.f32 %v1064, %v1073
      %v1104 = vadd.f32 %v1065, %v1073
      %v1105 = vadd.f32 %v1066, %v1073
      %v1106 = vadd.f32 %v1067, %v1073
      %v1107 = vmax.f32 %v1075, 0.0
      %v1108 = vmax.f32 %v1076, 0.0
      %v1109 = vmax.f32 %v1077, 0.0
      %v1110 = vmax.f32 %v1078, 0.0
      %v1111 = vmax.f32 %v1079, 0.0
      %v1112 = vmax.f32 %v1080, 0.0
      %v1113 = vmax.f32 %v1081, 0.0
      %v1114 = vmax.f32 %v1082, 0.0
      %v1115 = vmax.f32 %v1083, 0.0
      %v1116 = vmax.f32 %v1084, 0.0
      %v1117 = vmax.f32 %v1085, 0.0
      %v1118 = vmax.f32 %v1086, 0.0
      %v1119 = vmax.f32 %v1087, 0.0
      %v1120 = vmax.f32 %v1088, 0.0
      %v1121 = vmax.f32 %v1089, 0.0
      %v1122 = vmax.f32 %v1090, 0.0
      %v1123 = vmax.f32 %v1091, 0.0
      %v1124 = vmax.f32 %v1092, 0.0
      %v1125 = vmax.f32 %v1093, 0.0
      %v1126 = vmax.f32 %v1094, 0.0
      %v1127 = vmax.f32 %v1095, 0.0
      %v1128 = vmax.f32 %v1096, 0.0
      %v1129 = vmax.f32 %v1097, 0.0
      %v1130 = vmax.f32 %v1098, 0.0
      %v1131 = vmax.f32 %v1099, 0.0
      %v1132 = vmax.f32 %v1100, 0.0
      %v1133 = vmax.f32 %v1101, 0.0
      %v1134 = vmax.f32 %v1102, 0.0
      %v1135 = vmax.f32 %v1103, 0.0
      %v1136 = vmax.f32 %v1104, 0.0
      %v1137 = vmax.f32 %v1105, 0.0
      %v1138 = vmax.f32 %v1106, 0.0
      %v1139 = vpack.c.bf16 %v1108, %v1107
      %v1140 = vpack.c.bf16 %v1110, %v1109
      %v1141 = vpack.c.bf16 %v1112, %v1111
      %v1142 = vpack.c.bf16 %v1114, %v1113
      %v1143 = vpack.c.bf16 %v1116, %v1115
      %v1144 = vpack.c.bf16 %v1118, %v1117
      %v1145 = vpack.c.bf16 %v1120, %v1119
      %v1146 = vpack.c.bf16 %v1122, %v1121
      %v1147 = vpack.c.bf16 %v1124, %v1123
      %v1148 = vpack.c.bf16 %v1126, %v1125
      %v1149 = vpack.c.bf16 %v1128, %v1127
      %v1150 = vpack.c.bf16 %v1130, %v1129
      %v1151 = vpack.c.bf16 %v1132, %v1131
      %v1152 = vpack.c.bf16 %v1134, %v1133
      %v1153 = vpack.c.bf16 %v1136, %v1135
      %v1154 = vpack.c.bf16 %v1138, %v1137
      %v1155 = vld [vmem:[%s3] sm:$0x3]
      %v1156 = vld [vmem:[%s4] sm:$0x1]
      %v1158 = vlaneseq
      %v1159 = vshrl.u32 %v1158, 7
      %v1160 = vsub.s32 0, %v1159
      %v1161 = vrot.slane %v1156, %v1160
      %vm1163 = vcmask 31744
      %v1165 = vsel %vm1163, %v1139, 0
      %v1168 = vsel %vm1163, %v1140, 0
      %v1171 = vsel %vm1163, %v1141, 0
      %v1174 = vsel %vm1163, %v1142, 0
      %v1177 = vsel %vm1163, %v1143, 0
      %v1180 = vsel %vm1163, %v1144, 0
      %v1183 = vsel %vm1163, %v1145, 0
      %v1186 = vsel %vm1163, %v1146, 0
      %v1189 = vsel %vm1163, %v1147, 0
      %v1192 = vsel %vm1163, %v1148, 0
      %v1195 = vsel %vm1163, %v1149, 0
      %v1198 = vsel %vm1163, %v1150, 0
      %v1201 = vsel %vm1163, %v1151, 0
      %v1204 = vsel %vm1163, %v1152, 0
      %v1207 = vsel %vm1163, %v1153, 0
      %v1210 = vsel %vm1163, %v1154, 0
      %vm1212 = vcmask 1041408
      %v1214 = vsel %vm1212, %v1155, 0
      %1216 = vmatprep.subr.bf16.mxu0 0
      %1217 = vmatpush1.bf16.msra.mxu0 %v1214
      %1218 = vmatprep.subr.bf16.mxu0 0
      %1219 = vmatpush1.bf16.msra.mxu0 0
      %1220 = vmatprep.subr.bf16.mxu0 0
      %1221 = vmatpush1.bf16.msra.mxu0 0
      %1222 = vmatprep.subr.bf16.mxu0 0
      %1223 = vmatpush1.bf16.msra.mxu0 0
      %1224 = vmatprep.subr.bf16.mxu0 0
      %1225 = vmatpush1.bf16.msra.mxu0 0
      %1226 = vmatprep.subr.bf16.mxu0 0
      %1227 = vmatpush1.bf16.msra.mxu0 0
      %1228 = vmatprep.subr.bf16.mxu0 0
      %1229 = vmatpush1.bf16.msra.mxu0 0
      %1230 = vmatprep.subr.bf16.mxu0 0
      %1231 = vmatpush1.bf16.msra.mxu0 0
      %1232 = vmatprep.subr.bf16.mxu0 0
      %1233 = vmatpush1.bf16.msra.mxu0 0
      %1234 = vmatprep.subr.bf16.mxu0 0
      %1235 = vmatpush1.bf16.msra.mxu0 0
      %1236 = vmatprep.subr.bf16.mxu0 0
      %1237 = vmatpush1.bf16.msra.mxu0 0
      %1238 = vmatprep.subr.bf16.mxu0 0
      %1239 = vmatpush1.bf16.msra.mxu0 0
      %1240 = vmatprep.subr.bf16.mxu0 0
      %1241 = vmatpush1.bf16.msra.mxu0 0
      %1242 = vmatprep.subr.bf16.mxu0 0
      %1243 = vmatpush1.bf16.msra.mxu0 0
      %1244 = vmatprep.subr.bf16.mxu0 0
      %1245 = vmatpush1.bf16.msra.mxu0 0
      %1246 = vmatprep.subr.bf16.mxu0 0
      %1247 = vmatpush1.bf16.msra.mxu0 0
      %1248 = vmatprep.mubr.bf16.mxu0 0
      %1249 = vmatmul.mubr.bf16.gmra.mrb[0].mxu0 %v1165
      %v1250 = vpop.f32.mrb[0].mxu0
      %v1251 = vadd.f32 %v1161, %v1250
      %v1252 = vpop.f32.mrb[0].mxu0
      %v1253 = vpop.f32.mrb[0].mxu0
      %v1254 = vadd.f32 %v1161, %v1253
      %v1255 = vpop.f32.mrb[0].mxu0
      %1256 = vmatprep.mubr.bf16.mxu0 0
      %1257 = vmatmul.mubr.bf16.gmra.mrb[0].mxu0 %v1168
      %v1258 = vpop.f32.mrb[0].mxu0
      %v1259 = vadd.f32 %v1161, %v1258
      %v1260 = vpop.f32.mrb[0].mxu0
      %v1261 = vpop.f32.mrb[0].mxu0
      %v1262 = vadd.f32 %v1161, %v1261
      %v1263 = vpop.f32.mrb[0].mxu0
      %1264 = vmatprep.mubr.bf16.mxu0 0
      %1265 = vmatmul.mubr.bf16.gmra.mrb[0].mxu0 %v1171
      %v1266 = vpop.f32.mrb[0].mxu0
      %v1267 = vadd.f32 %v1161, %v1266
      %v1268 = vpop.f32.mrb[0].mxu0
      %v1269 = vpop.f32.mrb[0].mxu0
      %v1270 = vadd.f32 %v1161, %v1269
      %v1271 = vpop.f32.mrb[0].mxu0
      %1272 = vmatprep.mubr.bf16.mxu0 0
      %1273 = vmatmul.mubr.bf16.gmra.mrb[0].mxu0 %v1174
      %v1274 = vpop.f32.mrb[0].mxu0
      %v1275 = vadd.f32 %v1161, %v1274
      %v1276 = vpop.f32.mrb[0].mxu0
      %v1277 = vpop.f32.mrb[0].mxu0
      %v1278 = vadd.f32 %v1161, %v1277
      %v1279 = vpop.f32.mrb[0].mxu0
      %1280 = vmatprep.mubr.bf16.mxu0 0
      %1281 = vmatmul.mubr.bf16.gmra.mrb[0].mxu0 %v1177
      %v1282 = vpop.f32.mrb[0].mxu0
      %v1283 = vadd.f32 %v1161, %v1282
      %v1284 = vpop.f32.mrb[0].mxu0
      %v1285 = vpop.f32.mrb[0].mxu0
      %v1286 = vadd.f32 %v1161, %v1285
      %v1287 = vpop.f32.mrb[0].mxu0
      %1288 = vmatprep.mubr.bf16.mxu0 0
      %1289 = vmatmul.mubr.bf16.gmra.mrb[0].mxu0 %v1180
      %v1290 = vpop.f32.mrb[0].mxu0
      %v1291 = vadd.f32 %v1161, %v1290
      %v1292 = vpop.f32.mrb[0].mxu0
      %v1293 = vpop.f32.mrb[0].mxu0
      %v1294 = vadd.f32 %v1161, %v1293
      %v1295 = vpop.f32.mrb[0].mxu0
      %1296 = vmatprep.mubr.bf16.mxu0 0
      %1297 = vmatmul.mubr.bf16.gmra.mrb[0].mxu0 %v1183
      %v1298 = vpop.f32.mrb[0].mxu0
      %v1299 = vadd.f32 %v1161, %v1298
      %v1300 = vpop.f32.mrb[0].mxu0
      %v1301 = vpop.f32.mrb[0].mxu0
      %v1302 = vadd.f32 %v1161, %v1301
      %v1303 = vpop.f32.mrb[0].mxu0
      %1304 = vmatprep.mubr.bf16.mxu0 0
      %1305 = vmatmul.mubr.bf16.gmra.mrb[0].mxu0 %v1186
      %v1306 = vpop.f32.mrb[0].mxu0
      %v1307 = vadd.f32 %v1161, %v1306
      %v1308 = vpop.f32.mrb[0].mxu0
      %v1309 = vpop.f32.mrb[0].mxu0
      %v1310 = vadd.f32 %v1161, %v1309
      %v1311 = vpop.f32.mrb[0].mxu0
      %1312 = vmatprep.mubr.bf16.mxu0 0
      %1313 = vmatmul.mubr.bf16.gmra.mrb[0].mxu0 %v1189
      %v1314 = vpop.f32.mrb[0].mxu0
      %v1315 = vadd.f32 %v1161, %v1314
      %v1316 = vpop.f32.mrb[0].mxu0
      %v1317 = vpop.f32.mrb[0].mxu0
      %v1318 = vadd.f32 %v1161, %v1317
      %v1319 = vpop.f32.mrb[0].mxu0
      %1320 = vmatprep.mubr.bf16.mxu0 0
      %1321 = vmatmul.mubr.bf16.gmra.mrb[0].mxu0 %v1192
      %v1322 = vpop.f32.mrb[0].mxu0
      %v1323 = vadd.f32 %v1161, %v1322
      %v1324 = vpop.f32.mrb[0].mxu0
      %v1325 = vpop.f32.mrb[0].mxu0
      %v1326 = vadd.f32 %v1161, %v1325
      %v1327 = vpop.f32.mrb[0].mxu0
      %1328 = vmatprep.mubr.bf16.mxu0 0
      %1329 = vmatmul.mubr.bf16.gmra.mrb[0].mxu0 %v1195
      %v1330 = vpop.f32.mrb[0].mxu0
      %v1331 = vadd.f32 %v1161, %v1330
      %v1332 = vpop.f32.mrb[0].mxu0
      %v1333 = vpop.f32.mrb[0].mxu0
      %v1334 = vadd.f32 %v1161, %v1333
      %v1335 = vpop.f32.mrb[0].mxu0
      %1336 = vmatprep.mubr.bf16.mxu0 0
      %1337 = vmatmul.mubr.bf16.gmra.mrb[0].mxu0 %v1198
      %v1338 = vpop.f32.mrb[0].mxu0
      %v1339 = vadd.f32 %v1161, %v1338
      %v1340 = vpop.f32.mrb[0].mxu0
      %v1341 = vpop.f32.mrb[0].mxu0
      %v1342 = vadd.f32 %v1161, %v1341
      %v1343 = vpop.f32.mrb[0].mxu0
      %1344 = vmatprep.mubr.bf16.mxu0 0
      %1345 = vmatmul.mubr.bf16.gmra.mrb[0].mxu0 %v1201
      %v1346 = vpop.f32.mrb[0].mxu0
      %v1347 = vadd.f32 %v1161, %v1346
      %v1348 = vpop.f32.mrb[0].mxu0
      %v1349 = vpop.f32.mrb[0].mxu0
      %v1350 = vadd.f32 %v1161, %v1349
      %v1351 = vpop.f32.mrb[0].mxu0
      %1352 = vmatprep.mubr.bf16.mxu0 0
      %1353 = vmatmul.mubr.bf16.gmra.mrb[0].mxu0 %v1204
      %v1354 = vpop.f32.mrb[0].mxu0
      %v1355 = vadd.f32 %v1161, %v1354
      %v1356 = vpop.f32.mrb[0].mxu0
      %v1357 = vpop.f32.mrb[0].mxu0
      %v1358 = vadd.f32 %v1161, %v1357
      %v1359 = vpop.f32.mrb[0].mxu0
      %1360 = vmatprep.mubr.bf16.mxu0 0
      %1361 = vmatmul.mubr.bf16.gmra.mrb[0].mxu0 %v1207
      %v1362 = vpop.f32.mrb[0].mxu0
      %v1363 = vadd.f32 %v1161, %v1362
      %v1364 = vpop.f32.mrb[0].mxu0
      %v1365 = vpop.f32.mrb[0].mxu0
      %v1366 = vadd.f32 %v1161, %v1365
      %v1367 = vpop.f32.mrb[0].mxu0
      %1368 = vmatprep.mubr.bf16.mxu0 0
      %1369 = vmatmul.mubr.bf16.gmra.mrb[0].mxu0 %v1210
      %v1370 = vpop.f32.mrb[0].mxu0
      %v1371 = vadd.f32 %v1161, %v1370
      %v1372 = vpop.f32.mrb[0].mxu0
      %v1373 = vpop.f32.mrb[0].mxu0
      %v1374 = vadd.f32 %v1161, %v1373
      %v1375 = vpop.f32.mrb[0].mxu0
      %1376 = vdwg.mxu0
      %v1377 = vmax.f32 %v1251, 0.0
      %v1378 = vmax.f32 %v1254, 0.0
      %v1379 = vmax.f32 %v1259, 0.0
      %v1380 = vmax.f32 %v1262, 0.0
      %v1381 = vmax.f32 %v1267, 0.0
      %v1382 = vmax.f32 %v1270, 0.0
      %v1383 = vmax.f32 %v1275, 0.0
      %v1384 = vmax.f32 %v1278, 0.0
      %v1385 = vmax.f32 %v1283, 0.0
      %v1386 = vmax.f32 %v1286, 0.0
      %v1387 = vmax.f32 %v1291, 0.0
      %v1388 = vmax.f32 %v1294, 0.0
      %v1389 = vmax.f32 %v1299, 0.0
      %v1390 = vmax.f32 %v1302, 0.0
      %v1391 = vmax.f32 %v1307, 0.0
      %v1392 = vmax.f32 %v1310, 0.0
      %v1393 = vmax.f32 %v1315, 0.0
      %v1394 = vmax.f32 %v1318, 0.0
      %v1395 = vmax.f32 %v1323, 0.0
      %v1396 = vmax.f32 %v1326, 0.0
      %v1397 = vmax.f32 %v1331, 0.0
      %v1398 = vmax.f32 %v1334, 0.0
      %v1399 = vmax.f32 %v1339, 0.0
      %v1400 = vmax.f32 %v1342, 0.0
      %v1401 = vmax.f32 %v1347, 0.0
      %v1402 = vmax.f32 %v1350, 0.0
      %v1403 = vmax.f32 %v1355, 0.0
      %v1404 = vmax.f32 %v1358, 0.0
      %v1405 = vmax.f32 %v1363, 0.0
      %v1406 = vmax.f32 %v1366, 0.0
      %v1407 = vmax.f32 %v1371, 0.0
      %v1408 = vmax.f32 %v1374, 0.0
      %v1409 = vpack.c.bf16 %v1378, %v1377
      %v1410 = vpack.c.bf16 %v1380, %v1379
      %v1411 = vpack.c.bf16 %v1382, %v1381
      %v1412 = vpack.c.bf16 %v1384, %v1383
      %v1413 = vpack.c.bf16 %v1386, %v1385
      %v1414 = vpack.c.bf16 %v1388, %v1387
      %v1415 = vpack.c.bf16 %v1390, %v1389
      %v1416 = vpack.c.bf16 %v1392, %v1391
      %v1417 = vpack.c.bf16 %v1394, %v1393
      %v1418 = vpack.c.bf16 %v1396, %v1395
      %v1419 = vpack.c.bf16 %v1398, %v1397
      %v1420 = vpack.c.bf16 %v1400, %v1399
      %v1421 = vpack.c.bf16 %v1402, %v1401
      %v1422 = vpack.c.bf16 %v1404, %v1403
      %v1423 = vpack.c.bf16 %v1406, %v1405
      %v1424 = vpack.c.bf16 %v1408, %v1407
      %v1441 = vunpack.c.l.b16 %v1409
      %v1442 = vunpack.c.h.b16 %v1409
      %v1443 = vunpack.c.l.b16 %v1410
      %v1444 = vunpack.c.h.b16 %v1410
      %v1445 = vunpack.c.l.b16 %v1411
      %v1446 = vunpack.c.h.b16 %v1411
      %v1447 = vunpack.c.l.b16 %v1412
      %v1448 = vunpack.c.h.b16 %v1412
      %v1449 = vunpack.c.l.b16 %v1413
      %v1450 = vunpack.c.h.b16 %v1413
      %v1451 = vunpack.c.l.b16 %v1414
      %v1452 = vunpack.c.h.b16 %v1414
      %v1453 = vunpack.c.l.b16 %v1415
      %v1454 = vunpack.c.h.b16 %v1415
      %v1455 = vunpack.c.l.b16 %v1416
      %v1456 = vunpack.c.h.b16 %v1416
      %v1457 = vunpack.c.l.b16 %v1417
      %v1458 = vunpack.c.h.b16 %v1417
      %v1459 = vunpack.c.l.b16 %v1418
      %v1460 = vunpack.c.h.b16 %v1418
      %v1461 = vunpack.c.l.b16 %v1419
      %v1462 = vunpack.c.h.b16 %v1419
      %v1463 = vunpack.c.l.b16 %v1420
      %v1464 = vunpack.c.h.b16 %v1420
      %v1465 = vunpack.c.l.b16 %v1421
      %v1466 = vunpack.c.h.b16 %v1421
      %v1467 = vunpack.c.l.b16 %v1422
      %v1468 = vunpack.c.h.b16 %v1422
      %v1469 = vunpack.c.l.b16 %v1423
      %v1470 = vunpack.c.h.b16 %v1423
      %v1471 = vunpack.c.l.b16 %v1424
      %v1472 = vunpack.c.h.b16 %v1424
      %v1473 = vpack.c.b16 %v1441, %v1441
      %v1474 = vpack.c.b16 %v1442, %v1442
      %v1475 = vpack.c.b16 %v1443, %v1443
      %v1476 = vpack.c.b16 %v1444, %v1444
      %v1477 = vpack.c.b16 %v1445, %v1445
      %v1478 = vpack.c.b16 %v1446, %v1446
      %v1479 = vpack.c.b16 %v1447, %v1447
      %v1480 = vpack.c.b16 %v1448, %v1448
      %v1481 = vpack.c.b16 %v1449, %v1449
      %v1482 = vpack.c.b16 %v1450, %v1450
      %v1483 = vpack.c.b16 %v1451, %v1451
      %v1484 = vpack.c.b16 %v1452, %v1452
      %v1485 = vpack.c.b16 %v1453, %v1453
      %v1486 = vpack.c.b16 %v1454, %v1454
      %v1487 = vpack.c.b16 %v1455, %v1455
      %v1488 = vpack.c.b16 %v1456, %v1456
      %v1489 = vpack.c.b16 %v1457, %v1457
      %v1490 = vpack.c.b16 %v1458, %v1458
      %v1491 = vpack.c.b16 %v1459, %v1459
      %v1492 = vpack.c.b16 %v1460, %v1460
      %v1493 = vpack.c.b16 %v1461, %v1461
      %v1494 = vpack.c.b16 %v1462, %v1462
      %v1495 = vpack.c.b16 %v1463, %v1463
      %v1496 = vpack.c.b16 %v1464, %v1464
      %v1497 = vpack.c.b16 %v1465, %v1465
      %v1498 = vpack.c.b16 %v1466, %v1466
      %v1499 = vpack.c.b16 %v1467, %v1467
      %v1500 = vpack.c.b16 %v1468, %v1468
      %v1501 = vpack.c.b16 %v1469, %v1469
      %v1502 = vpack.c.b16 %v1470, %v1470
      %v1503 = vpack.c.b16 %v1471, %v1471
      %v1504 = vpack.c.b16 %v1472, %v1472
      %vm1537 = vcmask 60416
      %1538 = vst.msk [vmem:[%s224] sm:$0xf] %vm1537, %v1473
      %1539 = vst.msk [vmem:[%s224 + $0x4] sm:$0xf] %vm1537, %v1474
      %1540 = vst.msk [vmem:[%s224 + $0x8] sm:$0xf] %vm1537, %v1475
      %1541 = vst.msk [vmem:[%s224 + $0xc] sm:$0xf] %vm1537, %v1476
      %1542 = vst.msk [vmem:[%s224 + $0x10] sm:$0xf] %vm1537, %v1477
      %1543 = vst.msk [vmem:[%s224 + $0x14] sm:$0xf] %vm1537, %v1478
      %1544 = vst.msk [vmem:[%s224 + $0x18] sm:$0xf] %vm1537, %v1479
      %1545 = vst.msk [vmem:[%s224 + $0x1c] sm:$0xf] %vm1537, %v1480
      %1546 = vst.msk [vmem:[%s224 + $0x20] sm:$0xf] %vm1537, %v1481
      %1547 = vst.msk [vmem:[%s224 + $0x24] sm:$0xf] %vm1537, %v1482
      %1548 = vst.msk [vmem:[%s224 + $0x28] sm:$0xf] %vm1537, %v1483
      %1549 = vst.msk [vmem:[%s224 + $0x2c] sm:$0xf] %vm1537, %v1484
      %1550 = vst.msk [vmem:[%s224 + $0x30] sm:$0xf] %vm1537, %v1485
      %1551 = vst.msk [vmem:[%s224 + $0x34] sm:$0xf] %vm1537, %v1486
      %1552 = vst.msk [vmem:[%s224 + $0x38] sm:$0xf] %vm1537, %v1487
      %1553 = vst.msk [vmem:[%s224 + $0x3c] sm:$0xf] %vm1537, %v1488
      %1554 = vst.msk [vmem:[%s224 + $0x40] sm:$0xf] %vm1537, %v1489
      %1555 = vst.msk [vmem:[%s224 + $0x44] sm:$0xf] %vm1537, %v1490
      %1556 = vst.msk [vmem:[%s224 + $0x48] sm:$0xf] %vm1537, %v1491
      %1557 = vst.msk [vmem:[%s224 + $0x4c] sm:$0xf] %vm1537, %v1492
      %1558 = vst.msk [vmem:[%s224 + $0x50] sm:$0xf] %vm1537, %v1493
      %1559 = vst.msk [vmem:[%s224 + $0x54] sm:$0xf] %vm1537, %v1494
      %1560 = vst.msk [vmem:[%s224 + $0x58] sm:$0xf] %vm1537, %v1495
      %1561 = vst.msk [vmem:[%s224 + $0x5c] sm:$0xf] %vm1537, %v1496
      %1562 = vst.msk [vmem:[%s224 + $0x60] sm:$0xf] %vm1537, %v1497
      %1563 = vst.msk [vmem:[%s224 + $0x64] sm:$0xf] %vm1537, %v1498
      %1564 = vst.msk [vmem:[%s224 + $0x68] sm:$0xf] %vm1537, %v1499
      %1565 = vst.msk [vmem:[%s224 + $0x6c] sm:$0xf] %vm1537, %v1500
      %1566 = vst.msk [vmem:[%s224 + $0x70] sm:$0xf] %vm1537, %v1501
      %1567 = vst.msk [vmem:[%s224 + $0x74] sm:$0xf] %vm1537, %v1502
      %1568 = vst.msk [vmem:[%s224 + $0x78] sm:$0xf] %vm1537, %v1503
      %1569 = vst.msk [vmem:[%s224 + $0x7c] sm:$0xf] %vm1537, %v1504
      %p1570 = scmp.lt.s32.totalorder %s16, 1
      %s1571 = scalar_select %p1570, %s16, 1
      %s1572 = smul.addr %s1571, 32
      %s1573 = smul.addr %s1572, 4
      %s1574 = scalar_lea.vmem %s5, %s1573
      // Predicated region
      $region41: #{tpu_custom_call.1} parent=39 // pred_check
        %p1575 = pneg %p144
      $region42: #{tpu_custom_call.1} parent=39 // pred_check_branch
        %1577 = sbr.rel (%p1575) target = $region44
      $region43: #{tpu_custom_call.1} parent=39 // pred_region
        _
      $region44: #{tpu_custom_call.1} parent=39 // pred_fallthru
        _
    $region40: #{tpu_custom_call.1} parent=5 // pred_fallthru
      _
    %p1578 = scmp.le.s32.totalorder 2, %s11
    // Predicated region
    $region45: #{tpu_custom_call.1} parent=5 // pred_check
      %p1579 = pneg %p1578
    $region46: #{tpu_custom_call.1} parent=5 // pred_check_branch
      %1581 = sbr.rel (%p1579) target = $region48
    $region47: #{tpu_custom_call.1} parent=5 // pred_region
      %s1582 = ssub.s32 %s11, 2
      // Predicated region
      $region49: #{tpu_custom_call.1} parent=47 // pred_check
        %p1583 = pneg %p150
      $region50: #{tpu_custom_call.1} parent=47 // pred_check_branch
        %1585 = sbr.rel (%p1583) target = $region52
      $region51: #{tpu_custom_call.1} parent=47 // pred_region
        %p1586 = scmp.lt.s32.totalorder %s17, 1
        %s1587 = scalar_select %p1586, %s17, 1
        %s1588 = smul.addr %s1587, 32
        %s1589 = smul.addr %s1588, 4
        %s1590 = scalar_lea.vmem %s5, %s1589
      $region52: #{tpu_custom_call.1} parent=47 // pred_fallthru
        _
    $region48: #{tpu_custom_call.1} parent=5 // pred_fallthru
      _
  $region6: #{tpu_custom_call.1} parent=0 // loop_footer
    %s15 = sadd.s32 1, %s11
  $region7: #{tpu_custom_call.1} parent=0 // loop_footer_branch
    %10 = sbr.rel target = $region3
  $region8: #{tpu_custom_call.1} parent=0 // loop_exit
    _

</llo_original>
